<compile_context>
chip_gen: v7x
topology: tpu7x:2x2x1
jax: 0.10.0
libtpu: 0.0.40
codegen_flags: <defaults>
</compile_context>

<pallas_src>
import jax
import jax.numpy as jnp
from jax import lax
from jax.experimental import pallas as pl
from jax.experimental.pallas import tpu as pltpu


def _round_up(x, m):
    return ((x + m - 1) // m) * m


def _flatten_lane_dense(w):
    """(N, D) -> (rows, 128) lane-dense layout, zero-padded so rows % 8 == 0."""
    n = int(w.shape[0]) * int(w.shape[1])
    rows = _round_up(pl.cdiv(n, 128), 8)
    total = rows * 128
    flat = w.reshape(-1)
    if total != n:
        flat = jnp.pad(flat, (0, total - n))   # zeros are neutral for max|.|
    return flat.reshape(rows, 128), rows


def dg_bpr_loss(users, pos_items, neg_items, pos_scores, neg_scores,
                P_weight, Q_weight, old_P_weight, old_Q_weight, delta_mask,
                alpha=1.0, beta=1.0,
                table_block_bytes=2 * 1024 * 1024,
                batch_block_bytes=256 * 1024):
    """Returns (loss, Lbpr, loss_sim, Lreg) as float32 scalars."""
    B = int(pos_scores.shape[0])
    nP, D = (int(s) for s in P_weight.shape)
    nQ, Dq = (int(s) for s in Q_weight.shape)
    assert D == Dq, "P and Q embedding dims must match"

    # ---- Lane-dense table flattening (free reshape when n*D % 1024 == 0) ----
    pw_flat, rows_p = _flatten_lane_dense(P_weight)
    qw_flat, rows_q = _flatten_lane_dense(Q_weight)

    def _table_tile(rows, itemsize):
        t = max(8, (table_block_bytes // (128 * itemsize)) // 8 * 8)
        return min(t, rows)

    tile_p = _table_tile(rows_p, P_weight.dtype.itemsize)
    tile_q = _table_tile(rows_q, Q_weight.dtype.itemsize)
    p_tiles = pl.cdiv(rows_p, tile_p)
    q_tiles = pl.cdiv(rows_q, tile_q)

    # ---- Batch chunking (scores + gathered embeddings share the grid axis) --
    e_isz = P_weight.dtype.itemsize
    tile_b = max(128, (batch_block_bytes // max(1, D * e_isz)) // 128 * 128)
    tile_b = min(tile_b, _round_up(B, 128))
    b_tiles = pl.cdiv(B, tile_b)
    B_pad = b_tiles * tile_b
    srows = tile_b // 128

    def _pad_idx(idx):
        idx = idx.reshape(-1)
        return jnp.pad(idx, (0, B_pad - B)) if B_pad != B else idx

    users_i = _pad_idx(users)
    pos_i = _pad_idx(pos_items)
    neg_i = _pad_idx(neg_items)

    # Glue: embedding lookups (nn.Embedding == row gather), kept in native dtype.
    users_e = jnp.take(P_weight, users_i, axis=0)            # (B_pad, D)
    old_users_e = jnp.take(old_P_weight, users_i, axis=0)    # detached (fwd only)
    pos_e = jnp.take(Q_weight, pos_i, axis=0)
    old_pos_e = jnp.take(old_Q_weight, pos_i, axis=0)
    neg_e = jnp.take(Q_weight, neg_i, axis=0)
    old_neg_e = jnp.take(old_Q_weight, neg_i, axis=0)

    def _prep_scores(s):
        s = s.reshape(-1)
        if B_pad != B:
            s = jnp.pad(s, (0, B_pad - B))
        return s.reshape(b_tiles, srows, 128)                # lane-dense chunks

    pos_s = _prep_scores(pos_scores)
    neg_s = _prep_scores(neg_scores)

    mask2d = delta_mask.reshape(1, D)
    ab = jnp.asarray([alpha, beta], dtype=jnp.float32)

    n_steps = max(p_tiles, q_tiles, b_tiles)

    # --------------------------- kernel body ---------------------------------
    def kernel(ab_ref, pos_ref, neg_ref, mask_ref,
               ue_ref, oue_ref, pe_ref, ope_ref, ne_ref, one_ref,
               pw_ref, qw_ref,
               loss_ref, lbpr_ref, lsim_ref, lreg_ref,
               accp_ref, accq_ref, accb_ref, accs_ref):
        i = pl.program_id(0)
        last = pl.num_programs(0) - 1

        @pl.when(i == 0)
        def _init():
            accp_ref[...] = jnp.zeros_like(accp_ref)
            accq_ref[...] = jnp.zeros_like(accq_ref)
            accb_ref[...] = jnp.zeros_like(accb_ref)
            accs_ref[...] = jnp.zeros_like(accs_ref)

        def gate(tiles, need_mask, fn):
            # Valid steps only; the masked variant runs only on the partial
            # last tile, so the steady state pays no iota/compare/select and
            # clamped "stale tile" steps (i >= tiles) do no work at all.
            if need_mask:
                @pl.when(i < tiles - 1)
                def _steady():
                    fn(False)

                @pl.when(i == tiles - 1)
                def _last():
                    fn(True)
            else:
                @pl.when(i < tiles)
                def _steady():
                    fn(False)

        # ---- Streaming max|.| over the lane-dense tables (VPU only) ---------
        def table_update(t_ref, acc_ref, tile, tiles, rows, masked):
            a = jnp.abs(t_ref[...].astype(jnp.float32))          # (tile, 128)
            if masked:  # static: only traced for the partial-last-tile branch
                gr = ((tiles - 1) * tile
                      + lax.broadcasted_iota(jnp.int32, a.shape, 0))
                a = jnp.where(gr < rows, a, 0.0)
            red = jnp.max(a.reshape(tile // 8, 8, 128), axis=0)  # (8, 128)
            acc_ref[...] = jnp.maximum(acc_ref[...], red)

        gate(p_tiles, rows_p % tile_p != 0,
             lambda m: table_update(pw_ref, accp_ref, tile_p, p_tiles, rows_p, m))
        gate(q_tiles, rows_q % tile_q != 0,
             lambda m: table_update(qw_ref, accq_ref, tile_q, q_tiles, rows_q, m))

        # ---- Batch-blocked BPR + masked-L1 similarity ------------------------
        def batch_update(masked):
            # BPR: -logsigmoid(x) = softplus(-x), numerically stable form.
            x = pos_ref[...].astype(jnp.float32) - neg_ref[...].astype(jnp.float32)
            nls = jnp.maximum(-x, 0.0) + jnp.log1p(jnp.exp(-jnp.abs(x)))
            # Similarity: |delta_mask * (e - old_e)|, all three terms combined.
            m = mask_ref[...].astype(jnp.float32)                # (1, D)
            d = (jnp.abs(m * (ue_ref[...].astype(jnp.float32)
                              - oue_ref[...].astype(jnp.float32)))
                 + jnp.abs(m * (pe_ref[...].astype(jnp.float32)
                                - ope_ref[...].astype(jnp.float32)))
                 + jnp.abs(m * (ne_ref[...].astype(jnp.float32)
                                - one_ref[...].astype(jnp.float32))))
            if masked:  # static: only traced for the partial last batch chunk
                base = (b_tiles - 1) * tile_b
                sflat = (base
                         + lax.broadcasted_iota(jnp.int32, nls.shape, 1) * 128
                         + lax.broadcasted_iota(jnp.int32, nls.shape, 2))
                nls = jnp.where(sflat < B, nls, 0.0)
                erow = base + lax.broadcasted_iota(jnp.int32, d.shape, 0)
                d = jnp.where(erow < B, d, 0.0)
            accb_ref[...] += nls[0]                              # (srows, 128)
            accs_ref[...] += jnp.sum(d.reshape(tile_b // 8, 8, D), axis=0)

        gate(b_tiles, B % tile_b != 0, batch_update)

        # ---- Finalize: single cross-lane reduces, (1,1) vector outputs -------
        @pl.when(i == last)
        def _finalize():
            alpha_v = ab_ref[0]
            beta_v = ab_ref[1]
            lbpr = jnp.sum(accb_ref[...], keepdims=True) * jnp.float32(1.0 / B)
            lreg = beta_v * (jnp.max(accp_ref[...], keepdims=True)
                             + jnp.max(accq_ref[...], keepdims=True))
            lsim = alpha_v * jnp.sum(accs_ref[...], keepdims=True)
            loss_ref[...] = lbpr + lreg + lsim
            lbpr_ref[...] = lbpr
            lsim_ref[...] = lsim
            lreg_ref[...] = lreg

    # --------------------------- pallas_call ----------------------------------
    smem = pl.BlockSpec(memory_space=pltpu.MemorySpace.SMEM)
    vmem = pl.BlockSpec(memory_space=pltpu.MemorySpace.VMEM)

    def bmap2(tiles):
        return lambda i: (jnp.minimum(i, tiles - 1), 0)

    def bmap3(tiles):
        return lambda i: (jnp.minimum(i, tiles - 1), 0, 0)

    emb_spec = pl.BlockSpec((tile_b, D), bmap2(b_tiles))
    score_spec = pl.BlockSpec((1, srows, 128), bmap3(b_tiles))
    scalar_out = pl.BlockSpec((1, 1), lambda i: (0, 0))
    scalar_shape = jax.ShapeDtypeStruct((1, 1), jnp.float32)

    grid_spec = pltpu.PrefetchScalarGridSpec(
        num_scalar_prefetch=0,
        grid=(n_steps,),
        in_specs=[smem,                                          # alpha / beta
                  score_spec, score_spec,                        # pos/neg scores
                  vmem,                                          # delta mask (1,D)
                  emb_spec, emb_spec, emb_spec,                  # ue, oue, pe
                  emb_spec, emb_spec, emb_spec,                  # ope, ne, one
                  pl.BlockSpec((tile_p, 128), bmap2(p_tiles)),   # P stream
                  pl.BlockSpec((tile_q, 128), bmap2(q_tiles))],  # Q stream
        out_specs=[scalar_out] * 4,
        scratch_shapes=[pltpu.VMEM((8, 128), jnp.float32),       # running max|P|
                        pltpu.VMEM((8, 128), jnp.float32),       # running max|Q|
                        pltpu.VMEM((srows, 128), jnp.float32),   # BPR partials
                        pltpu.VMEM((8, D), jnp.float32)])        # sim partials

    loss, lbpr, lsim, lreg = pl.pallas_call(
        kernel,
        out_shape=[scalar_shape] * 4,
        grid_spec=grid_spec,
        compiler_params=pltpu.CompilerParams(
            dimension_semantics=("arbitrary",),
            vmem_limit_bytes=40 * 1024 * 1024),
    )(ab, pos_s, neg_s, mask2d,
      users_e, old_users_e, pos_e, old_pos_e, neg_e, old_neg_e,
      pw_flat, qw_flat)

    return loss[0, 0], lbpr[0, 0], lsim[0, 0], lreg[0, 0]


def _reference(users, pos_items, neg_items, pos_scores, neg_scores,
               P_w, Q_w, old_P_w, old_Q_w, delta_mask, alpha, beta):
    x = (pos_scores - neg_scores).astype(jnp.float32)
    lbpr = jnp.mean(jnp.maximum(-x, 0.0) + jnp.log1p(jnp.exp(-jnp.abs(x))))
    lreg = beta * (jnp.max(jnp.abs(P_w)) + jnp.max(jnp.abs(Q_w)))
    ue, oue = P_w[users], old_P_w[users]
    pe, ope = Q_w[pos_items], old_Q_w[pos_items]
    ne, one = Q_w[neg_items], old_Q_w[neg_items]
    m = delta_mask[None, :]
    lsim = alpha * (jnp.sum(jnp.abs(m * (ue - oue)))
                    + jnp.sum(jnp.abs(m * (pe - ope)))
                    + jnp.sum(jnp.abs(m * (ne - one))))
    return lbpr + lreg + lsim, lbpr, lsim, lreg


if __name__ == "__main__":
    def run_case(B, D, n_users, n_items, alpha, beta, key,
                 table_block_bytes=2 * 1024 * 1024,
                 batch_block_bytes=256 * 1024):
        keys = jax.random.split(key, 10)
        users = jax.random.randint(keys[0], (B,), 0, n_users, dtype=jnp.int32)
        pos_items = jax.random.randint(keys[1], (B,), 0, n_items, dtype=jnp.int32)
        neg_items = jax.random.randint(keys[2], (B,), 0, n_items, dtype=jnp.int32)
        pos_scores = jax.random.normal(keys[3], (B,), dtype=jnp.float32)
        neg_scores = jax.random.normal(keys[4], (B,), dtype=jnp.float32)
        P_w = 0.1 * jax.random.normal(keys[5], (n_users, D), dtype=jnp.float32)
        Q_w = 0.1 * jax.random.normal(keys[6], (n_items, D), dtype=jnp.float32)
        old_P_w = P_w + 0.01 * jax.random.normal(keys[7], (n_users, D), jnp.float32)
        old_Q_w = Q_w + 0.01 * jax.random.normal(keys[8], (n_items, D), jnp.float32)
        delta_mask = (jax.random.uniform(keys[9], (D,)) > 0.5).astype(jnp.float32)

        got = dg_bpr_loss(users, pos_items, neg_items, pos_scores, neg_scores,
                          P_w, Q_w, old_P_w, old_Q_w, delta_mask,
                          alpha=alpha, beta=beta,
                          table_block_bytes=table_block_bytes,
                          batch_block_bytes=batch_block_bytes)
        got = jax.block_until_ready(got)
        want = _reference(users, pos_items, neg_items, pos_scores, neg_scores,
                          P_w, Q_w, old_P_w, old_Q_w, delta_mask, alpha, beta)
        for g, w in zip(got, want):
            assert jnp.allclose(g, w, rtol=1e-3, atol=1e-3), (g, w)

    key = jax.random.PRNGKey(0)
    k1, k2, k3 = jax.random.split(key, 3)

    # Tiny case: single grid step, D < 128 (lane-dense flatten pads tables).
    run_case(B=8, D=32, n_users=16, n_items=24, alpha=1.0, beta=1.0, key=k1)
    # Multi-tile case: small block sizes force table streaming, clamped index
    # maps, partial-last-tile masking, and batch chunking with a masked tail.
    run_case(B=300, D=128, n_users=1000, n_items=700, alpha=0.5, beta=2.0,
             key=k2, table_block_bytes=8 * 1024, batch_block_bytes=64 * 1024)
    # D a multiple of 128 (free flatten) with an exact batch tile (no masks).
    run_case(B=256, D=256, n_users=64, n_items=48, alpha=1.5, beta=0.5, key=k3)

    print("KERNEL_OK")
</pallas_src>

<mosaic_0001>
module attributes {stable_mosaic.version = 11 : i64} {
  func.func @kernel(%arg0: i32, %arg1: memref<2xf32, #tpu.memory_space<smem>>, %arg2: memref<1x1x128xf32, #tpu.memory_space<vmem>>, %arg3: memref<1x1x128xf32, #tpu.memory_space<vmem>>, %arg4: memref<1x32xf32, #tpu.memory_space<vmem>>, %arg5: memref<128x32xf32, #tpu.memory_space<vmem>>, %arg6: memref<128x32xf32, #tpu.memory_space<vmem>>, %arg7: memref<128x32xf32, #tpu.memory_space<vmem>>, %arg8: memref<128x32xf32, #tpu.memory_space<vmem>>, %arg9: memref<128x32xf32, #tpu.memory_space<vmem>>, %arg10: memref<128x32xf32, #tpu.memory_space<vmem>>, %arg11: memref<8x128xf32, #tpu.memory_space<vmem>>, %arg12: memref<8x128xf32, #tpu.memory_space<vmem>>, %arg13: memref<1x1xf32, #tpu.memory_space<vmem>>, %arg14: memref<1x1xf32, #tpu.memory_space<vmem>>, %arg15: memref<1x1xf32, #tpu.memory_space<vmem>>, %arg16: memref<1x1xf32, #tpu.memory_space<vmem>>, %arg17: memref<8x128xf32, #tpu.memory_space<vmem>>, %arg18: memref<8x128xf32, #tpu.memory_space<vmem>>, %arg19: memref<1x128xf32, #tpu.memory_space<vmem>>, %arg20: memref<8x32xf32, #tpu.memory_space<vmem>>) attributes {dimension_semantics = [#tpu.dimension_semantics<arbitrary>], iteration_bounds = array<i64: 1>, scalar_prefetch = 0 : i64, scratch_operands = 4 : i64, tpu.core_type = #tpu.core_type<tc>, window_params = [{transform_indices = @transform_0, window_bounds = array<i64: 2>}, {transform_indices = @transform_1, window_bounds = array<i64: 1, 1, 128>}, {transform_indices = @transform_2, window_bounds = array<i64: 1, 1, 128>}, {pipeline_mode = #tpu.pipeline_mode<synchronous>, transform_indices = @transform_3, window_bounds = array<i64: 1, 32>}, {transform_indices = @transform_4, window_bounds = array<i64: 128, 32>}, {transform_indices = @transform_5, window_bounds = array<i64: 128, 32>}, {transform_indices = @transform_6, window_bounds = array<i64: 128, 32>}, {transform_indices = @transform_7, window_bounds = array<i64: 128, 32>}, {transform_indices = @transform_8, window_bounds = array<i64: 128, 32>}, {transform_indices = @transform_9, window_bounds = array<i64: 128, 32>}, {transform_indices = @transform_10, window_bounds = array<i64: 8, 128>}, {transform_indices = @transform_11, window_bounds = array<i64: 8, 128>}, {pipeline_mode = #tpu.pipeline_mode<synchronous>, transform_indices = @transform_12, window_bounds = array<i64: 1, 1>}, {pipeline_mode = #tpu.pipeline_mode<synchronous>, transform_indices = @transform_13, window_bounds = array<i64: 1, 1>}, {pipeline_mode = #tpu.pipeline_mode<synchronous>, transform_indices = @transform_14, window_bounds = array<i64: 1, 1>}, {pipeline_mode = #tpu.pipeline_mode<synchronous>, transform_indices = @transform_15, window_bounds = array<i64: 1, 1>}]} {
    %c0_i32 = arith.constant 0 : i32
    %0 = arith.cmpi eq, %arg0, %c0_i32 : i32
    %1 = arith.extui %0 : i1 to i32
    %c0_i32_0 = arith.constant 0 : i32
    %2 = arith.cmpi ne, %1, %c0_i32_0 : i32
    scf.if %2 {
      %cst = arith.constant 0.000000e+00 : f32
      %18 = vector.broadcast %cst : f32 to vector<8x128xf32>
      %c0 = arith.constant 0 : index
      %c0_10 = arith.constant 0 : index
      %19 = vector.load %arg17[%c0, %c0_10] : memref<8x128xf32, #tpu.memory_space<vmem>>, vector<8x128xf32>
      tpu.vector_store %arg17[%c0, %c0_10], %18 {strides = array<i32>} : memref<8x128xf32, #tpu.memory_space<vmem>>, vector<8x128xf32>,
      %cst_11 = arith.constant 0.000000e+00 : f32
      %20 = vector.broadcast %cst_11 : f32 to vector<8x128xf32>
      %c0_12 = arith.constant 0 : index
      %c0_13 = arith.constant 0 : index
      %21 = vector.load %arg18[%c0_12, %c0_13] : memref<8x128xf32, #tpu.memory_space<vmem>>, vector<8x128xf32>
      tpu.vector_store %arg18[%c0_12, %c0_13], %20 {strides = array<i32>} : memref<8x128xf32, #tpu.memory_space<vmem>>, vector<8x128xf32>,
      %cst_14 = arith.constant 0.000000e+00 : f32
      %22 = vector.broadcast %cst_14 : f32 to vector<1x128xf32>
      %c0_15 = arith.constant 0 : index
      %c0_16 = arith.constant 0 : index
      %23 = vector.load %arg19[%c0_15, %c0_16] : memref<1x128xf32, #tpu.memory_space<vmem>>, vector<1x128xf32>
      tpu.vector_store %arg19[%c0_15, %c0_16], %22 {strides = array<i32>} : memref<1x128xf32, #tpu.memory_space<vmem>>, vector<1x128xf32>,
      %cst_17 = arith.constant 0.000000e+00 : f32
      %24 = vector.broadcast %cst_17 : f32 to vector<8x32xf32>
      %c0_18 = arith.constant 0 : index
      %c0_19 = arith.constant 0 : index
      %25 = vector.load %arg20[%c0_18, %c0_19] : memref<8x32xf32, #tpu.memory_space<vmem>>, vector<8x32xf32>
      tpu.vector_store %arg20[%c0_18, %c0_19], %24 {strides = array<i32>} : memref<8x32xf32, #tpu.memory_space<vmem>>, vector<8x32xf32>,
    } else {
    }
    %c1_i32 = arith.constant 1 : i32
    %3 = arith.cmpi slt, %arg0, %c1_i32 : i32
    %4 = arith.extui %3 : i1 to i32
    %c0_i32_1 = arith.constant 0 : i32
    %5 = arith.cmpi ne, %4, %c0_i32_1 : i32
    scf.if %5 {
      %c0 = arith.constant 0 : index
      %c0_10 = arith.constant 0 : index
      %18 = vector.load %arg11[%c0, %c0_10] : memref<8x128xf32, #tpu.memory_space<vmem>>, vector<8x128xf32>
      %19 = math.absf %18 : vector<8x128xf32>
      %20 = vector.shape_cast %19 : vector<8x128xf32> to vector<1x8x128xf32>
      %cst = arith.constant dense<0xFF800000> : vector<8x128xf32>
      %21 = vector.multi_reduction <maximumf>, %20, %cst [0] : vector<1x8x128xf32> to vector<8x128xf32>
      %c0_11 = arith.constant 0 : index
      %c0_12 = arith.constant 0 : index
      %22 = vector.load %arg17[%c0_11, %c0_12] : memref<8x128xf32, #tpu.memory_space<vmem>>, vector<8x128xf32>
      %23 = arith.maximumf %22, %21 : vector<8x128xf32>
      %c0_13 = arith.constant 0 : index
      %c0_14 = arith.constant 0 : index
      %24 = vector.load %arg17[%c0_13, %c0_14] : memref<8x128xf32, #tpu.memory_space<vmem>>, vector<8x128xf32>
      tpu.vector_store %arg17[%c0_13, %c0_14], %23 {strides = array<i32>} : memref<8x128xf32, #tpu.memory_space<vmem>>, vector<8x128xf32>,
    } else {
    }
    %c1_i32_2 = arith.constant 1 : i32
    %6 = arith.cmpi slt, %arg0, %c1_i32_2 : i32
    %7 = arith.extui %6 : i1 to i32
    %c0_i32_3 = arith.constant 0 : i32
    %8 = arith.cmpi ne, %7, %c0_i32_3 : i32
    scf.if %8 {
      %c0 = arith.constant 0 : index
      %c0_10 = arith.constant 0 : index
      %18 = vector.load %arg12[%c0, %c0_10] : memref<8x128xf32, #tpu.memory_space<vmem>>, vector<8x128xf32>
      %19 = math.absf %18 : vector<8x128xf32>
      %20 = vector.shape_cast %19 : vector<8x128xf32> to vector<1x8x128xf32>
      %cst = arith.constant dense<0xFF800000> : vector<8x128xf32>
      %21 = vector.multi_reduction <maximumf>, %20, %cst [0] : vector<1x8x128xf32> to vector<8x128xf32>
      %c0_11 = arith.constant 0 : index
      %c0_12 = arith.constant 0 : index
      %22 = vector.load %arg18[%c0_11, %c0_12] : memref<8x128xf32, #tpu.memory_space<vmem>>, vector<8x128xf32>
      %23 = arith.maximumf %22, %21 : vector<8x128xf32>
      %c0_13 = arith.constant 0 : index
      %c0_14 = arith.constant 0 : index
      %24 = vector.load %arg18[%c0_13, %c0_14] : memref<8x128xf32, #tpu.memory_space<vmem>>, vector<8x128xf32>
      tpu.vector_store %arg18[%c0_13, %c0_14], %23 {strides = array<i32>} : memref<8x128xf32, #tpu.memory_space<vmem>>, vector<8x128xf32>,
    } else {
    }
    %c0_i32_4 = arith.constant 0 : i32
    %9 = arith.cmpi slt, %arg0, %c0_i32_4 : i32
    %10 = arith.extui %9 : i1 to i32
    %c0_i32_5 = arith.constant 0 : i32
    %11 = arith.cmpi ne, %10, %c0_i32_5 : i32
    scf.if %11 {
      %c0 = arith.constant 0 : index
      %c0_10 = arith.constant 0 : index
      %c0_11 = arith.constant 0 : index
      %18 = vector.load %arg2[%c0, %c0_10, %c0_11] : memref<1x1x128xf32, #tpu.memory_space<vmem>>, vector<1x1x128xf32>
      %c0_12 = arith.constant 0 : index
      %c0_13 = arith.constant 0 : index
      %c0_14 = arith.constant 0 : index
      %19 = vector.load %arg3[%c0_12, %c0_13, %c0_14] : memref<1x1x128xf32, #tpu.memory_space<vmem>>, vector<1x1x128xf32>
      %20 = arith.subf %18, %19 : vector<1x1x128xf32>
      %cst = arith.constant 0.000000e+00 : f32
      %21 = vector.broadcast %cst : f32 to vector<1x1x128xf32>
      %22 = arith.subf %21, %20 : vector<1x1x128xf32>
      %cst_15 = arith.constant 0.000000e+00 : f32
      %23 = vector.broadcast %cst_15 : f32 to vector<1x1x128xf32>
      %24 = arith.maximumf %22, %23 : vector<1x1x128xf32>
      %25 = math.absf %20 : vector<1x1x128xf32>
      %cst_16 = arith.constant 0.000000e+00 : f32
      %26 = vector.broadcast %cst_16 : f32 to vector<1x1x128xf32>
      %27 = arith.subf %26, %25 : vector<1x1x128xf32>
      %28 = math.exp %27 : vector<1x1x128xf32>
      %29 = math.log1p %28 : vector<1x1x128xf32>
      %30 = arith.addf %24, %29 : vector<1x1x128xf32>
      %c0_17 = arith.constant 0 : index
      %c0_18 = arith.constant 0 : index
      %31 = vector.load %arg4[%c0_17, %c0_18] : memref<1x32xf32, #tpu.memory_space<vmem>>, vector<1x32xf32>
      %c0_19 = arith.constant 0 : index
      %c0_20 = arith.constant 0 : index
      %32 = vector.load %arg5[%c0_19, %c0_20] : memref<128x32xf32, #tpu.memory_space<vmem>>, vector<128x32xf32>
      %c0_21 = arith.constant 0 : index
      %c0_22 = arith.constant 0 : index
      %33 = vector.load %arg6[%c0_21, %c0_22] : memref<128x32xf32, #tpu.memory_space<vmem>>, vector<128x32xf32>
      %34 = arith.subf %32, %33 : vector<128x32xf32>
      %35 = vector.broadcast %31 : vector<1x32xf32> to vector<128x32xf32>
      %36 = arith.mulf %35, %34 : vector<128x32xf32>
      %37 = math.absf %36 : vector<128x32xf32>
      %c0_23 = arith.constant 0 : index
      %c0_24 = arith.constant 0 : index
      %38 = vector.load %arg7[%c0_23, %c0_24] : memref<128x32xf32, #tpu.memory_space<vmem>>, vector<128x32xf32>
      %c0_25 = arith.constant 0 : index
      %c0_26 = arith.constant 0 : index
      %39 = vector.load %arg8[%c0_25, %c0_26] : memref<128x32xf32, #tpu.memory_space<vmem>>, vector<128x32xf32>
      %40 = arith.subf %38, %39 : vector<128x32xf32>
      %41 = vector.broadcast %31 : vector<1x32xf32> to vector<128x32xf32>
      %42 = arith.mulf %41, %40 : vector<128x32xf32>
      %43 = math.absf %42 : vector<128x32xf32>
      %44 = arith.addf %37, %43 : vector<128x32xf32>
      %c0_27 = arith.constant 0 : index
      %c0_28 = arith.constant 0 : index
      %45 = vector.load %arg9[%c0_27, %c0_28] : memref<128x32xf32, #tpu.memory_space<vmem>>, vector<128x32xf32>
      %c0_29 = arith.constant 0 : index
      %c0_30 = arith.constant 0 : index
      %46 = vector.load %arg10[%c0_29, %c0_30] : memref<128x32xf32, #tpu.memory_space<vmem>>, vector<128x32xf32>
      %47 = arith.subf %45, %46 : vector<128x32xf32>
      %48 = vector.broadcast %31 : vector<1x32xf32> to vector<128x32xf32>
      %49 = arith.mulf %48, %47 : vector<128x32xf32>
      %50 = math.absf %49 : vector<128x32xf32>
      %51 = arith.addf %44, %50 : vector<128x32xf32>
      %c0_31 = arith.constant 0 : index
      %c0_32 = arith.constant 0 : index
      %52 = vector.load %arg19[%c0_31, %c0_32] : memref<1x128xf32, #tpu.memory_space<vmem>>, vector<1x128xf32>
      %53 = vector.shape_cast %30 : vector<1x1x128xf32> to vector<1x128xf32>
      %54 = arith.addf %52, %53 : vector<1x128xf32>
      %c0_33 = arith.constant 0 : index
      %c0_34 = arith.constant 0 : index
      %55 = vector.load %arg19[%c0_33, %c0_34] : memref<1x128xf32, #tpu.memory_space<vmem>>, vector<1x128xf32>
      tpu.vector_store %arg19[%c0_33, %c0_34], %54 {strides = array<i32>} : memref<1x128xf32, #tpu.memory_space<vmem>>, vector<1x128xf32>,
      %c0_35 = arith.constant 0 : index
      %c0_36 = arith.constant 0 : index
      %56 = vector.load %arg20[%c0_35, %c0_36] : memref<8x32xf32, #tpu.memory_space<vmem>>, vector<8x32xf32>
      %57 = vector.shape_cast %51 : vector<128x32xf32> to vector<16x8x32xf32>
      %cst_37 = arith.constant dense<0.000000e+00> : vector<8x32xf32>
      %58 = vector.multi_reduction <add>, %57, %cst_37 [0] : vector<16x8x32xf32> to vector<8x32xf32>
      %59 = arith.addf %56, %58 : vector<8x32xf32>
      %c0_38 = arith.constant 0 : index
      %c0_39 = arith.constant 0 : index
      %60 = vector.load %arg20[%c0_38, %c0_39] : memref<8x32xf32, #tpu.memory_space<vmem>>, vector<8x32xf32>
      tpu.vector_store %arg20[%c0_38, %c0_39], %59 {strides = array<i32>} : memref<8x32xf32, #tpu.memory_space<vmem>>, vector<8x32xf32>,
    } else {
    }
    %c0_i32_6 = arith.constant 0 : i32
    %12 = arith.cmpi eq, %arg0, %c0_i32_6 : i32
    %13 = arith.extui %12 : i1 to i32
    %c0_i32_7 = arith.constant 0 : i32
    %14 = arith.cmpi ne, %13, %c0_i32_7 : i32
    scf.if %14 {
      %c0 = arith.constant 0 : index
      %c0_10 = arith.constant 0 : index
      %c0_11 = arith.constant 0 : index
      %18 = vector.load %arg2[%c0, %c0_10, %c0_11] : memref<1x1x128xf32, #tpu.memory_space<vmem>>, vector<1x1x128xf32>
      %c0_12 = arith.constant 0 : index
      %c0_13 = arith.constant 0 : index
      %c0_14 = arith.constant 0 : index
      %19 = vector.load %arg3[%c0_12, %c0_13, %c0_14] : memref<1x1x128xf32, #tpu.memory_space<vmem>>, vector<1x1x128xf32>
      %20 = arith.subf %18, %19 : vector<1x1x128xf32>
      %cst = arith.constant 0.000000e+00 : f32
      %21 = vector.broadcast %cst : f32 to vector<1x1x128xf32>
      %22 = arith.subf %21, %20 : vector<1x1x128xf32>
      %cst_15 = arith.constant 0.000000e+00 : f32
      %23 = vector.broadcast %cst_15 : f32 to vector<1x1x128xf32>
      %24 = arith.maximumf %22, %23 : vector<1x1x128xf32>
      %25 = math.absf %20 : vector<1x1x128xf32>
      %cst_16 = arith.constant 0.000000e+00 : f32
      %26 = vector.broadcast %cst_16 : f32 to vector<1x1x128xf32>
      %27 = arith.subf %26, %25 : vector<1x1x128xf32>
      %28 = math.exp %27 : vector<1x1x128xf32>
      %29 = math.log1p %28 : vector<1x1x128xf32>
      %30 = arith.addf %24, %29 : vector<1x1x128xf32>
      %c0_17 = arith.constant 0 : index
      %c0_18 = arith.constant 0 : index
      %31 = vector.load %arg4[%c0_17, %c0_18] : memref<1x32xf32, #tpu.memory_space<vmem>>, vector<1x32xf32>
      %c0_19 = arith.constant 0 : index
      %c0_20 = arith.constant 0 : index
      %32 = vector.load %arg5[%c0_19, %c0_20] : memref<128x32xf32, #tpu.memory_space<vmem>>, vector<128x32xf32>
      %c0_21 = arith.constant 0 : index
      %c0_22 = arith.constant 0 : index
      %33 = vector.load %arg6[%c0_21, %c0_22] : memref<128x32xf32, #tpu.memory_space<vmem>>, vector<128x32xf32>
      %34 = arith.subf %32, %33 : vector<128x32xf32>
      %35 = vector.broadcast %31 : vector<1x32xf32> to vector<128x32xf32>
      %36 = arith.mulf %35, %34 : vector<128x32xf32>
      %37 = math.absf %36 : vector<128x32xf32>
      %c0_23 = arith.constant 0 : index
      %c0_24 = arith.constant 0 : index
      %38 = vector.load %arg7[%c0_23, %c0_24] : memref<128x32xf32, #tpu.memory_space<vmem>>, vector<128x32xf32>
      %c0_25 = arith.constant 0 : index
      %c0_26 = arith.constant 0 : index
      %39 = vector.load %arg8[%c0_25, %c0_26] : memref<128x32xf32, #tpu.memory_space<vmem>>, vector<128x32xf32>
      %40 = arith.subf %38, %39 : vector<128x32xf32>
      %41 = vector.broadcast %31 : vector<1x32xf32> to vector<128x32xf32>
      %42 = arith.mulf %41, %40 : vector<128x32xf32>
      %43 = math.absf %42 : vector<128x32xf32>
      %44 = arith.addf %37, %43 : vector<128x32xf32>
      %c0_27 = arith.constant 0 : index
      %c0_28 = arith.constant 0 : index
      %45 = vector.load %arg9[%c0_27, %c0_28] : memref<128x32xf32, #tpu.memory_space<vmem>>, vector<128x32xf32>
      %c0_29 = arith.constant 0 : index
      %c0_30 = arith.constant 0 : index
      %46 = vector.load %arg10[%c0_29, %c0_30] : memref<128x32xf32, #tpu.memory_space<vmem>>, vector<128x32xf32>
      %47 = arith.subf %45, %46 : vector<128x32xf32>
      %48 = vector.broadcast %31 : vector<1x32xf32> to vector<128x32xf32>
      %49 = arith.mulf %48, %47 : vector<128x32xf32>
      %50 = math.absf %49 : vector<128x32xf32>
      %51 = arith.addf %44, %50 : vector<128x32xf32>
      %52 = tpu.iota {dimensions = array<i32: 1>} : vector<1x1x128xi32>
      %c128_i32 = arith.constant 128 : i32
      %53 = vector.broadcast %c128_i32 : i32 to vector<1x1x128xi32>
      %54 = arith.muli %52, %53 : vector<1x1x128xi32>
      %c0_i32_31 = arith.constant 0 : i32
      %55 = vector.broadcast %c0_i32_31 : i32 to vector<1x1x128xi32>
      %56 = arith.addi %55, %54 : vector<1x1x128xi32>
      %57 = tpu.iota {dimensions = array<i32: 2>} : vector<1x1x128xi32>
      %58 = arith.addi %56, %57 : vector<1x1x128xi32>
      %c8_i32 = arith.constant 8 : i32
      %59 = vector.broadcast %c8_i32 : i32 to vector<1x1x128xi32>
      %60 = arith.cmpi slt, %58, %59 : vector<1x1x128xi32>
      %cst_32 = arith.constant 0.000000e+00 : f32
      %61 = vector.broadcast %cst_32 : f32 to vector<1x1x128xf32>
      %62 = arith.select %60, %30, %61 : vector<1x1x128xi1>, vector<1x1x128xf32>
      %63 = tpu.iota {dimensions = array<i32: 0>} : vector<128x32xi32>
      %c0_i32_33 = arith.constant 0 : i32
      %64 = vector.broadcast %c0_i32_33 : i32 to vector<128x32xi32>
      %65 = arith.addi %64, %63 : vector<128x32xi32>
      %c8_i32_34 = arith.constant 8 : i32
      %66 = vector.broadcast %c8_i32_34 : i32 to vector<128x32xi32>
      %67 = arith.cmpi slt, %65, %66 : vector<128x32xi32>
      %cst_35 = arith.constant 0.000000e+00 : f32
      %68 = vector.broadcast %cst_35 : f32 to vector<128x32xf32>
      %69 = arith.select %67, %51, %68 : vector<128x32xi1>, vector<128x32xf32>
      %c0_36 = arith.constant 0 : index
      %c0_37 = arith.constant 0 : index
      %70 = vector.load %arg19[%c0_36, %c0_37] : memref<1x128xf32, #tpu.memory_space<vmem>>, vector<1x128xf32>
      %71 = vector.shape_cast %62 : vector<1x1x128xf32> to vector<1x128xf32>
      %72 = arith.addf %70, %71 : vector<1x128xf32>
      %c0_38 = arith.constant 0 : index
      %c0_39 = arith.constant 0 : index
      %73 = vector.load %arg19[%c0_38, %c0_39] : memref<1x128xf32, #tpu.memory_space<vmem>>, vector<1x128xf32>
      tpu.vector_store %arg19[%c0_38, %c0_39], %72 {strides = array<i32>} : memref<1x128xf32, #tpu.memory_space<vmem>>, vector<1x128xf32>,
      %c0_40 = arith.constant 0 : index
      %c0_41 = arith.constant 0 : index
      %74 = vector.load %arg20[%c0_40, %c0_41] : memref<8x32xf32, #tpu.memory_space<vmem>>, vector<8x32xf32>
      %75 = vector.shape_cast %69 : vector<128x32xf32> to vector<16x8x32xf32>
      %cst_42 = arith.constant dense<0.000000e+00> : vector<8x32xf32>
      %76 = vector.multi_reduction <add>, %75, %cst_42 [0] : vector<16x8x32xf32> to vector<8x32xf32>
      %77 = arith.addf %74, %76 : vector<8x32xf32>
      %c0_43 = arith.constant 0 : index
      %c0_44 = arith.constant 0 : index
      %78 = vector.load %arg20[%c0_43, %c0_44] : memref<8x32xf32, #tpu.memory_space<vmem>>, vector<8x32xf32>
      tpu.vector_store %arg20[%c0_43, %c0_44], %77 {strides = array<i32>} : memref<8x32xf32, #tpu.memory_space<vmem>>, vector<8x32xf32>,
    } else {
    }
    %c0_i32_8 = arith.constant 0 : i32
    %15 = arith.cmpi eq, %arg0, %c0_i32_8 : i32
    %16 = arith.extui %15 : i1 to i32
    %c0_i32_9 = arith.constant 0 : i32
    %17 = arith.cmpi ne, %16, %c0_i32_9 : i32
    scf.if %17 {
      %c0 = arith.constant 0 : index
      %18 = memref.load %arg1[%c0] : memref<2xf32, #tpu.memory_space<smem>>
      %c1 = arith.constant 1 : index
      %19 = memref.load %arg1[%c1] : memref<2xf32, #tpu.memory_space<smem>>
      %c0_10 = arith.constant 0 : index
      %c0_11 = arith.constant 0 : index
      %20 = vector.load %arg19[%c0_10, %c0_11] : memref<1x128xf32, #tpu.memory_space<vmem>>, vector<1x128xf32>
      %21 = vector.shape_cast %20 : vector<1x128xf32> to vector<1x1x128xf32>
      %cst = arith.constant dense<0.000000e+00> : vector<1xf32>
      %22 = vector.multi_reduction <add>, %21, %cst [1, 2] : vector<1x1x128xf32> to vector<1xf32>
      %23 = vector.shape_cast %22 : vector<1xf32> to vector<1x1x1xf32>
      %24 = vector.extract %23[0, 0, 0] : f32 from vector<1x1x1xf32>
      %25 = vector.broadcast %24 : f32 to vector<1x1xf32>
      %cst_12 = arith.constant 1.250000e-01 : f32
      %26 = vector.broadcast %cst_12 : f32 to vector<1x1xf32>
      %27 = arith.mulf %25, %26 : vector<1x1xf32>
      %c0_13 = arith.constant 0 : index
      %c0_14 = arith.constant 0 : index
      %28 = vector.load %arg17[%c0_13, %c0_14] : memref<8x128xf32, #tpu.memory_space<vmem>>, vector<8x128xf32>
      %29 = vector.shape_cast %28 : vector<8x128xf32> to vector<1x8x128xf32>
      %cst_15 = arith.constant dense<0xFF800000> : vector<1xf32>
      %30 = vector.multi_reduction <maximumf>, %29, %cst_15 [1, 2] : vector<1x8x128xf32> to vector<1xf32>
      %31 = vector.shape_cast %30 : vector<1xf32> to vector<1x1x1xf32>
      %32 = vector.extract %31[0, 0, 0] : f32 from vector<1x1x1xf32>
      %33 = vector.broadcast %32 : f32 to vector<1x1xf32>
      %c0_16 = arith.constant 0 : index
      %c0_17 = arith.constant 0 : index
      %34 = vector.load %arg18[%c0_16, %c0_17] : memref<8x128xf32, #tpu.memory_space<vmem>>, vector<8x128xf32>
      %35 = vector.shape_cast %34 : vector<8x128xf32> to vector<1x8x128xf32>
      %cst_18 = arith.constant dense<0xFF800000> : vector<1xf32>
      %36 = vector.multi_reduction <maximumf>, %35, %cst_18 [1, 2] : vector<1x8x128xf32> to vector<1xf32>
      %37 = vector.shape_cast %36 : vector<1xf32> to vector<1x1x1xf32>
      %38 = vector.extract %37[0, 0, 0] : f32 from vector<1x1x1xf32>
      %39 = vector.broadcast %38 : f32 to vector<1x1xf32>
      %40 = arith.addf %33, %39 : vector<1x1xf32>
      %41 = vector.broadcast %19 : f32 to vector<1x1xf32>
      %42 = arith.mulf %41, %40 : vector<1x1xf32>
      %c0_19 = arith.constant 0 : index
      %c0_20 = arith.constant 0 : index
      %43 = vector.load %arg20[%c0_19, %c0_20] : memref<8x32xf32, #tpu.memory_space<vmem>>, vector<8x32xf32>
      %44 = vector.shape_cast %43 : vector<8x32xf32> to vector<1x8x32xf32>
      %cst_21 = arith.constant dense<0.000000e+00> : vector<1xf32>
      %45 = vector.multi_reduction <add>, %44, %cst_21 [1, 2] : vector<1x8x32xf32> to vector<1xf32>
      %46 = vector.shape_cast %45 : vector<1xf32> to vector<1x1x1xf32>
      %47 = vector.extract %46[0, 0, 0] : f32 from vector<1x1x1xf32>
      %48 = vector.broadcast %47 : f32 to vector<1x1xf32>
      %49 = vector.broadcast %18 : f32 to vector<1x1xf32>
      %50 = arith.mulf %49, %48 : vector<1x1xf32>
      %51 = arith.addf %27, %42 : vector<1x1xf32>
      %52 = arith.addf %51, %50 : vector<1x1xf32>
      %c0_22 = arith.constant 0 : index
      %c0_23 = arith.constant 0 : index
      %53 = vector.load %arg13[%c0_22, %c0_23] : memref<1x1xf32, #tpu.memory_space<vmem>>, vector<1x1xf32>
      tpu.vector_store %arg13[%c0_22, %c0_23], %52 {strides = array<i32>} : memref<1x1xf32, #tpu.memory_space<vmem>>, vector<1x1xf32>,
      %c0_24 = arith.constant 0 : index
      %c0_25 = arith.constant 0 : index
      %54 = vector.load %arg14[%c0_24, %c0_25] : memref<1x1xf32, #tpu.memory_space<vmem>>, vector<1x1xf32>
      tpu.vector_store %arg14[%c0_24, %c0_25], %27 {strides = array<i32>} : memref<1x1xf32, #tpu.memory_space<vmem>>, vector<1x1xf32>,
      %c0_26 = arith.constant 0 : index
      %c0_27 = arith.constant 0 : index
      %55 = vector.load %arg15[%c0_26, %c0_27] : memref<1x1xf32, #tpu.memory_space<vmem>>, vector<1x1xf32>
      tpu.vector_store %arg15[%c0_26, %c0_27], %50 {strides = array<i32>} : memref<1x1xf32, #tpu.memory_space<vmem>>, vector<1x1xf32>,
      %c0_28 = arith.constant 0 : index
      %c0_29 = arith.constant 0 : index
      %56 = vector.load %arg16[%c0_28, %c0_29] : memref<1x1xf32, #tpu.memory_space<vmem>>, vector<1x1xf32>
      tpu.vector_store %arg16[%c0_28, %c0_29], %42 {strides = array<i32>} : memref<1x1xf32, #tpu.memory_space<vmem>>, vector<1x1xf32>,
    } else {
    }
    return
  }
  func.func @transform_0(%arg0: i32) -> i32 {
    %c0_i32 = arith.constant 0 : i32
    %c0_i32_0 = arith.constant 0 : i32
    return %c0_i32 : i32
  }
  func.func @transform_1(%arg0: i32) -> (i32, i32, i32) {
    %c0_i32 = arith.constant 0 : i32
    %0 = arith.minsi %arg0, %c0_i32 : i32
    %c0_i32_0 = arith.constant 0 : i32
    %c0_i32_1 = arith.constant 0 : i32
    %c0_i32_2 = arith.constant 0 : i32
    return %0, %c0_i32_0, %c0_i32_1 : i32, i32, i32
  }
  func.func @transform_2(%arg0: i32) -> (i32, i32, i32) {
    %c0_i32 = arith.constant 0 : i32
    %0 = arith.minsi %arg0, %c0_i32 : i32
    %c0_i32_0 = arith.constant 0 : i32
    %c0_i32_1 = arith.constant 0 : i32
    %c0_i32_2 = arith.constant 0 : i32
    return %0, %c0_i32_0, %c0_i32_1 : i32, i32, i32
  }
  func.func @transform_3(%arg0: i32) -> (i32, i32) {
    %c0_i32 = arith.constant 0 : i32
    %c0_i32_0 = arith.constant 0 : i32
    %c0_i32_1 = arith.constant 0 : i32
    return %c0_i32, %c0_i32_0 : i32, i32
  }
  func.func @transform_4(%arg0: i32) -> (i32, i32) {
    %c0_i32 = arith.constant 0 : i32
    %0 = arith.minsi %arg0, %c0_i32 : i32
    %c0_i32_0 = arith.constant 0 : i32
    %c0_i32_1 = arith.constant 0 : i32
    return %0, %c0_i32_0 : i32, i32
  }
  func.func @transform_5(%arg0: i32) -> (i32, i32) {
    %c0_i32 = arith.constant 0 : i32
    %0 = arith.minsi %arg0, %c0_i32 : i32
    %c0_i32_0 = arith.constant 0 : i32
    %c0_i32_1 = arith.constant 0 : i32
    return %0, %c0_i32_0 : i32, i32
  }
  func.func @transform_6(%arg0: i32) -> (i32, i32) {
    %c0_i32 = arith.constant 0 : i32
    %0 = arith.minsi %arg0, %c0_i32 : i32
    %c0_i32_0 = arith.constant 0 : i32
    %c0_i32_1 = arith.constant 0 : i32
    return %0, %c0_i32_0 : i32, i32
  }
  func.func @transform_7(%arg0: i32) -> (i32, i32) {
    %c0_i32 = arith.constant 0 : i32
    %0 = arith.minsi %arg0, %c0_i32 : i32
    %c0_i32_0 = arith.constant 0 : i32
    %c0_i32_1 = arith.constant 0 : i32
    return %0, %c0_i32_0 : i32, i32
  }
  func.func @transform_8(%arg0: i32) -> (i32, i32) {
    %c0_i32 = arith.constant 0 : i32
    %0 = arith.minsi %arg0, %c0_i32 : i32
    %c0_i32_0 = arith.constant 0 : i32
    %c0_i32_1 = arith.constant 0 : i32
    return %0, %c0_i32_0 : i32, i32
  }
  func.func @transform_9(%arg0: i32) -> (i32, i32) {
    %c0_i32 = arith.constant 0 : i32
    %0 = arith.minsi %arg0, %c0_i32 : i32
    %c0_i32_0 = arith.constant 0 : i32
    %c0_i32_1 = arith.constant 0 : i32
    return %0, %c0_i32_0 : i32, i32
  }
  func.func @transform_10(%arg0: i32) -> (i32, i32) {
    %c0_i32 = arith.constant 0 : i32
    %0 = arith.minsi %arg0, %c0_i32 : i32
    %c0_i32_0 = arith.constant 0 : i32
    %c0_i32_1 = arith.constant 0 : i32
    return %0, %c0_i32_0 : i32, i32
  }
  func.func @transform_11(%arg0: i32) -> (i32, i32) {
    %c0_i32 = arith.constant 0 : i32
    %0 = arith.minsi %arg0, %c0_i32 : i32
    %c0_i32_0 = arith.constant 0 : i32
    %c0_i32_1 = arith.constant 0 : i32
    return %0, %c0_i32_0 : i32, i32
  }
  func.func @transform_12(%arg0: i32) -> (i32, i32) {
    %c0_i32 = arith.constant 0 : i32
    %c0_i32_0 = arith.constant 0 : i32
    %c0_i32_1 = arith.constant 0 : i32
    return %c0_i32, %c0_i32_0 : i32, i32
  }
  func.func @transform_13(%arg0: i32) -> (i32, i32) {
    %c0_i32 = arith.constant 0 : i32
    %c0_i32_0 = arith.constant 0 : i32
    %c0_i32_1 = arith.constant 0 : i32
    return %c0_i32, %c0_i32_0 : i32, i32
  }
  func.func @transform_14(%arg0: i32) -> (i32, i32) {
    %c0_i32 = arith.constant 0 : i32
    %c0_i32_0 = arith.constant 0 : i32
    %c0_i32_1 = arith.constant 0 : i32
    return %c0_i32, %c0_i32_0 : i32, i32
  }
  func.func @transform_15(%arg0: i32) -> (i32, i32) {
    %c0_i32 = arith.constant 0 : i32
    %c0_i32_0 = arith.constant 0 : i32
    %c0_i32_1 = arith.constant 0 : i32
    return %c0_i32, %c0_i32_0 : i32, i32
  }
}

</mosaic_0001>

<llo_original>
// kernel: tpu_custom_call.1
$region0: #{tpu_custom_call.1}
  #allocation0 [shape = 'u32[]', space=smem, size = 0x4, offset = 0x4, fixed_abs, tag = 'smem constant byte address 0x4 - core index']
  #allocation1 [shape = 'u32[144,128]{1,0:T(1,128)}', space=vmem, size = 0x12000, scoped, tag = 'internal scratch']
  #allocation2 [shape = 'f32[8,128]{1,0:T(8,128)}', space=vmem, size = 0x1000, scoped, tag = 'scratch operand']
  #allocation3 [shape = 'f32[8,128]{1,0:T(8,128)}', space=vmem, size = 0x1000, scoped, tag = 'scratch operand']
  #allocation4 [shape = 'f32[1,128]{1,0:T(1,128)}', space=vmem, size = 0x200, scoped, tag = 'scratch operand']
  #allocation5 [shape = 'f32[8,32]{1,0:T(8,128)}', space=vmem, size = 0x1000, scoped, tag = 'scratch operand']
  %s0 = inlined_call_operand.vmem [shape: f32[2], index: 0, kind: input, shape index: {}]
  %s1 = inlined_call_operand.vmem [shape: f32[1,1,128], index: 1, kind: input, shape index: {}]
  %s2 = inlined_call_operand.vmem [shape: f32[1,1,128], index: 2, kind: input, shape index: {}]
  %s3 = inlined_call_operand.vmem [shape: f32[1,32], index: 3, kind: input, shape index: {}]
  %s4 = inlined_call_operand.vmem [shape: f32[128,32], index: 4, kind: input, shape index: {}]
  %s5 = inlined_call_operand.vmem [shape: f32[128,32], index: 5, kind: input, shape index: {}]
  %s6 = inlined_call_operand.vmem [shape: f32[128,32], index: 6, kind: input, shape index: {}]
  %s7 = inlined_call_operand.vmem [shape: f32[128,32], index: 7, kind: input, shape index: {}]
  %s8 = inlined_call_operand.vmem [shape: f32[128,32], index: 8, kind: input, shape index: {}]
  %s9 = inlined_call_operand.vmem [shape: f32[128,32], index: 9, kind: input, shape index: {}]
  %s10 = inlined_call_operand.vmem [shape: f32[8,128], index: 10, kind: input, shape index: {}]
  %s11 = inlined_call_operand.vmem [shape: f32[8,128], index: 11, kind: input, shape index: {}]
  %s12 = inlined_call_operand.hbm [shape: f32[1,1], index: 12, kind: output, shape index: {0}]
  %s13 = inlined_call_operand.hbm [shape: f32[1,1], index: 13, kind: output, shape index: {1}]
  %s14 = inlined_call_operand.hbm [shape: f32[1,1], index: 14, kind: output, shape index: {2}]
  %s15 = inlined_call_operand.hbm [shape: f32[1,1], index: 15, kind: output, shape index: {3}]
  %16 = xla_tuple %s12, %s13, %s14, %s15
  %s17 = sld [smem:[#allocation0]]
  $region102: #{tpu_custom_call.1} parent=0
    _
  %s19 = ssub.s32 1, %s17
  %s20 = scalar_select 0, %s19, %s17
  $region1: #{tpu_custom_call.1} parent=0
    #allocation6 [shape = 'u8[512]{0}', space=smem, size = 0x200, scoped, tag = 'input window, operand 0, single buffered']
    #allocation7 [shape = 's32[1]{0}', space=sflag, size = 0x4, scoped, tag = 'scoped memory for tpu_custom_call.1']
    #allocation8 [shape = 's32[1]{0}', space=sflag, size = 0x4, scoped, tag = 'scoped memory for tpu_custom_call.1']
    #allocation9 [shape = 'u8[512]{0}', space=vmem, size = 0x400, scoped, tag = 'output window, operand 0, single buffered']
    #allocation10 [shape = 'u8[512]{0}', space=vmem, size = 0x400, scoped, tag = 'output window, operand 1, single buffered']
    #allocation11 [shape = 's32[1]{0}', space=sflag, size = 0x4, scoped, tag = 'scoped memory for tpu_custom_call.1']
    #allocation12 [shape = 'u8[512]{0}', space=vmem, size = 0x400, scoped, tag = 'output window, operand 2, single buffered']
    #allocation13 [shape = 'u8[512]{0}', space=vmem, size = 0x400, scoped, tag = 'output window, operand 3, single buffered']
    #allocation14 [shape = 's32[1]{0}', space=sflag, size = 0x4, scoped, tag = 'scoped memory for tpu_custom_call.1']
    %21 = vsyncpa [#allocation8], 0
    %22 = vsyncpa [#allocation7], 0
    %23 = vsyncpa [#allocation11], 0
    %24 = vsyncpa [#allocation14], 0
    // Predicated region
    $region2: #{tpu_custom_call.1} parent=1 // pred_check
      _
    $region3: #{tpu_custom_call.1} parent=1 // pred_check_branch
      %26 = sbr.rel (0) target = $region5
    $region4: #{tpu_custom_call.1} parent=1 // pred_region
      %s28 = ssub.s32 16, 16
      %29 = vsyncadd [#allocation8], %s28
      %s31 = sshll.u32 %s0, 4
      %s32 = int_to_ptr.vmem [resolvable:$true] %s31
      %34 = dma.vmem_to_smem %s32, 16, [#allocation6], [#allocation8]
    $region5: #{tpu_custom_call.1} parent=1 // pred_fallthru
      _
    // Predicated region
    $region6: #{tpu_custom_call.1} parent=1 // pred_check
      _
    $region7: #{tpu_custom_call.1} parent=1 // pred_check_branch
      %36 = sbr.rel (0) target = $region9
    $region8: #{tpu_custom_call.1} parent=1 // pred_region
      _
    $region9: #{tpu_custom_call.1} parent=1 // pred_fallthru
      _
    // Predicated region
    $region10: #{tpu_custom_call.1} parent=1 // pred_check
      _
    $region11: #{tpu_custom_call.1} parent=1 // pred_check_branch
      %38 = sbr.rel (0) target = $region13
    $region12: #{tpu_custom_call.1} parent=1 // pred_region
      _
    $region13: #{tpu_custom_call.1} parent=1 // pred_fallthru
      _
    // Predicated region
    $region14: #{tpu_custom_call.1} parent=1 // pred_check
      _
    $region15: #{tpu_custom_call.1} parent=1 // pred_check_branch
      %40 = sbr.rel (0) target = $region17
    $region16: #{tpu_custom_call.1} parent=1 // pred_region
      _
    $region17: #{tpu_custom_call.1} parent=1 // pred_fallthru
      _
    // Predicated region
    $region18: #{tpu_custom_call.1} parent=1 // pred_check
      _
    $region19: #{tpu_custom_call.1} parent=1 // pred_check_branch
      %42 = sbr.rel (0) target = $region21
    $region20: #{tpu_custom_call.1} parent=1 // pred_region
      _
    $region21: #{tpu_custom_call.1} parent=1 // pred_fallthru
      _
    // Predicated region
    $region22: #{tpu_custom_call.1} parent=1 // pred_check
      _
    $region23: #{tpu_custom_call.1} parent=1 // pred_check_branch
      %44 = sbr.rel (0) target = $region25
    $region24: #{tpu_custom_call.1} parent=1 // pred_region
      _
    $region25: #{tpu_custom_call.1} parent=1 // pred_fallthru
      _
    // Predicated region
    $region26: #{tpu_custom_call.1} parent=1 // pred_check
      _
    $region27: #{tpu_custom_call.1} parent=1 // pred_check_branch
      %46 = sbr.rel (0) target = $region29
    $region28: #{tpu_custom_call.1} parent=1 // pred_region
      _
    $region29: #{tpu_custom_call.1} parent=1 // pred_fallthru
      _
    // Predicated region
    $region30: #{tpu_custom_call.1} parent=1 // pred_check
      _
    $region31: #{tpu_custom_call.1} parent=1 // pred_check_branch
      %48 = sbr.rel (0) target = $region33
    $region32: #{tpu_custom_call.1} parent=1 // pred_region
      _
    $region33: #{tpu_custom_call.1} parent=1 // pred_fallthru
      _
    // Predicated region
    $region34: #{tpu_custom_call.1} parent=1 // pred_check
      _
    $region35: #{tpu_custom_call.1} parent=1 // pred_check_branch
      %50 = sbr.rel (0) target = $region37
    $region36: #{tpu_custom_call.1} parent=1 // pred_region
      _
    $region37: #{tpu_custom_call.1} parent=1 // pred_fallthru
      _
    // Predicated region
    $region38: #{tpu_custom_call.1} parent=1 // pred_check
      _
    $region39: #{tpu_custom_call.1} parent=1 // pred_check_branch
      %52 = sbr.rel (0) target = $region41
    $region40: #{tpu_custom_call.1} parent=1 // pred_region
      _
    $region41: #{tpu_custom_call.1} parent=1 // pred_fallthru
      _
    // Predicated region
    $region42: #{tpu_custom_call.1} parent=1 // pred_check
      _
    $region43: #{tpu_custom_call.1} parent=1 // pred_check_branch
      %54 = sbr.rel (0) target = $region45
    $region44: #{tpu_custom_call.1} parent=1 // pred_region
      _
    $region45: #{tpu_custom_call.1} parent=1 // pred_fallthru
      _
    // Predicated region
    $region46: #{tpu_custom_call.1} parent=1 // pred_check
      _
    $region47: #{tpu_custom_call.1} parent=1 // pred_check_branch
      %56 = sbr.rel (0) target = $region49
    $region48: #{tpu_custom_call.1} parent=1 // pred_region
      _
    $region49: #{tpu_custom_call.1} parent=1 // pred_fallthru
      _
    // Predicated region
    $region50: #{tpu_custom_call.1} parent=1 // pred_check
      _
    $region51: #{tpu_custom_call.1} parent=1 // pred_check_branch
      %58 = sbr.rel (0) target = $region53
    $region52: #{tpu_custom_call.1} parent=1 // pred_region
      %59 = dma.done [#allocation8], 16
    $region53: #{tpu_custom_call.1} parent=1 // pred_fallthru
      _
    %60 = sfence
    %p61 = scmp.eq.s32.totalorder 0, 0
    // Predicated region
    $region54: #{tpu_custom_call.1} parent=1 // pred_check
      %p62 = pneg %p61
    $region55: #{tpu_custom_call.1} parent=1 // pred_check_branch
      %64 = sbr.rel (%p62) target = $region57
    $region56: #{tpu_custom_call.1} parent=1 // pred_region
      %65 = vst [vmem:[#allocation2] sm:$0xff] 0.0
      %66 = vst [vmem:[#allocation3] sm:$0xff] 0.0
      %67 = vst [vmem:[#allocation4] sm:$0x1] 0.0
      %vm68 = vcmask 261120
      %69 = vst.msk [vmem:[#allocation5] sm:$0xff] %vm68, 0.0
    $region57: #{tpu_custom_call.1} parent=1 // pred_fallthru
      _
    %p70 = scmp.lt.s32.totalorder 0, 1
    // Predicated region
    $region58: #{tpu_custom_call.1} parent=1 // pred_check
      %p71 = pneg %p70
    $region59: #{tpu_custom_call.1} parent=1 // pred_check_branch
      %73 = sbr.rel (%p71) target = $region61
    $region60: #{tpu_custom_call.1} parent=1 // pred_region
      %v74 = vld [vmem:[%s10] sm:$0xff]
      %v75 = vand.u32 2147483647, %v74
      %v76 = vld [vmem:[#allocation2] sm:$0xff]
      %v77 = vmax.f32 %v76, %v75
      %78 = vst [vmem:[#allocation2] sm:$0xff] %v77
      %v79 = vld [vmem:[%s11] sm:$0xff]
      %v80 = vand.u32 2147483647, %v79
      %v81 = vld [vmem:[#allocation3] sm:$0xff]
      %v82 = vmax.f32 %v81, %v80
      %83 = vst [vmem:[#allocation3] sm:$0xff] %v82
    $region61: #{tpu_custom_call.1} parent=1 // pred_fallthru
      _
    %p84 = scmp.lt.s32.totalorder 0, 0
    // Predicated region
    $region62: #{tpu_custom_call.1} parent=1 // pred_check
      %p85 = pneg %p84
    $region63: #{tpu_custom_call.1} parent=1 // pred_check_branch
      %87 = sbr.rel (%p85) target = $region65
    $region64: #{tpu_custom_call.1} parent=1 // pred_region
      %v88 = vld [vmem:[%s1] sm:$0x1]
      %v89 = vld [vmem:[%s2] sm:$0x1]
      %v90 = vsub.f32 %v88, %v89
      %v91 = vsub.f32 0.0, %v90
      %v92 = vmax.f32 %v91, 0.0
      %v93 = vand.u32 2147483647, %v90
      %v94 = vsub.f32 0.0, %v93
      %v95 = vmul.f32 %v94, 1.442695
      %v96 = vpow.pop %v95
      %v97 = vadd.f32 %v96, 1.0
      %v98 = vlog2.pop %v97
      %v99 = vmul.f32 %v98, 0.6931472
      %v100 = vmul.f32 -0.5, %v96
      %v101 = vadd.f32 %v100, 1.0
      %v102 = vmul.f32 %v101, %v96
      %v103 = vand.u32 2147483647, %v96
      %vm104 = vcmp.lt.f32.partialorder %v103, 0.0004427343
      %v105 = vsel %vm104, %v102, %v99
      %v106 = vadd.f32 %v92, %v105
      %v107 = vld [vmem:[%s3] sm:$0x1]
      %v108 = vld [vmem:[%s4] sm:$0xff]
      %v109 = vld [vmem:[%s4 + $0x8] sm:$0xff]
      %v110 = vld [vmem:[%s4 + $0x10] sm:$0xff]
      %v111 = vld [vmem:[%s4 + $0x18] sm:$0xff]
      %v112 = vld [vmem:[%s4 + $0x20] sm:$0xff]
      %v113 = vld [vmem:[%s4 + $0x28] sm:$0xff]
      %v114 = vld [vmem:[%s4 + $0x30] sm:$0xff]
      %v115 = vld [vmem:[%s4 + $0x38] sm:$0xff]
      %v116 = vld [vmem:[%s4 + $0x40] sm:$0xff]
      %v117 = vld [vmem:[%s4 + $0x48] sm:$0xff]
      %v118 = vld [vmem:[%s4 + $0x50] sm:$0xff]
      %v119 = vld [vmem:[%s4 + $0x58] sm:$0xff]
      %v120 = vld [vmem:[%s4 + $0x60] sm:$0xff]
      %v121 = vld [vmem:[%s4 + $0x68] sm:$0xff]
      %v122 = vld [vmem:[%s4 + $0x70] sm:$0xff]
      %v123 = vld [vmem:[%s4 + $0x78] sm:$0xff]
      %v124 = vld [vmem:[%s5] sm:$0xff]
      %v125 = vld [vmem:[%s5 + $0x8] sm:$0xff]
      %v126 = vld [vmem:[%s5 + $0x10] sm:$0xff]
      %v127 = vld [vmem:[%s5 + $0x18] sm:$0xff]
      %v128 = vld [vmem:[%s5 + $0x20] sm:$0xff]
      %v129 = vld [vmem:[%s5 + $0x28] sm:$0xff]
      %v130 = vld [vmem:[%s5 + $0x30] sm:$0xff]
      %v131 = vld [vmem:[%s5 + $0x38] sm:$0xff]
      %v132 = vld [vmem:[%s5 + $0x40] sm:$0xff]
      %v133 = vld [vmem:[%s5 + $0x48] sm:$0xff]
      %v134 = vld [vmem:[%s5 + $0x50] sm:$0xff]
      %v135 = vld [vmem:[%s5 + $0x58] sm:$0xff]
      %v136 = vld [vmem:[%s5 + $0x60] sm:$0xff]
      %v137 = vld [vmem:[%s5 + $0x68] sm:$0xff]
      %v138 = vld [vmem:[%s5 + $0x70] sm:$0xff]
      %v139 = vld [vmem:[%s5 + $0x78] sm:$0xff]
      %v140 = vsub.f32 %v108, %v124
      %v141 = vsub.f32 %v109, %v125
      %v142 = vsub.f32 %v110, %v126
      %v143 = vsub.f32 %v111, %v127
      %v144 = vsub.f32 %v112, %v128
      %v145 = vsub.f32 %v113, %v129
      %v146 = vsub.f32 %v114, %v130
      %v147 = vsub.f32 %v115, %v131
      %v148 = vsub.f32 %v116, %v132
      %v149 = vsub.f32 %v117, %v133
      %v150 = vsub.f32 %v118, %v134
      %v151 = vsub.f32 %v119, %v135
      %v152 = vsub.f32 %v120, %v136
      %v153 = vsub.f32 %v121, %v137
      %v154 = vsub.f32 %v122, %v138
      %v155 = vsub.f32 %v123, %v139
      %v157 = vlaneseq
      %v158 = vshrl.u32 %v157, 7
      %v159 = vsub.s32 0, %v158
      %v160 = vrot.slane %v107, %v159
      %v162 = vmul.f32 %v160, %v140
      %v163 = vmul.f32 %v160, %v141
      %v164 = vmul.f32 %v160, %v142
      %v165 = vmul.f32 %v160, %v143
      %v166 = vmul.f32 %v160, %v144
      %v167 = vmul.f32 %v160, %v145
      %v168 = vmul.f32 %v160, %v146
      %v169 = vmul.f32 %v160, %v147
      %v170 = vmul.f32 %v160, %v148
      %v171 = vmul.f32 %v160, %v149
      %v172 = vmul.f32 %v160, %v150
      %v173 = vmul.f32 %v160, %v151
      %v174 = vmul.f32 %v160, %v152
      %v175 = vmul.f32 %v160, %v153
      %v176 = vmul.f32 %v160, %v154
      %v177 = vmul.f32 %v160, %v155
      %v178 = vand.u32 2147483647, %v162
      %v179 = vand.u32 2147483647, %v163
      %v180 = vand.u32 2147483647, %v164
      %v181 = vand.u32 2147483647, %v165
      %v182 = vand.u32 2147483647, %v166
      %v183 = vand.u32 2147483647, %v167
      %v184 = vand.u32 2147483647, %v168
      %v185 = vand.u32 2147483647, %v169
      %v186 = vand.u32 2147483647, %v170
      %v187 = vand.u32 2147483647, %v171
      %v188 = vand.u32 2147483647, %v172
      %v189 = vand.u32 2147483647, %v173
      %v190 = vand.u32 2147483647, %v174
      %v191 = vand.u32 2147483647, %v175
      %v192 = vand.u32 2147483647, %v176
      %v193 = vand.u32 2147483647, %v177
      %v194 = vld [vmem:[%s6] sm:$0xff]
      %v195 = vld [vmem:[%s6 + $0x8] sm:$0xff]
      %v196 = vld [vmem:[%s6 + $0x10] sm:$0xff]
      %v197 = vld [vmem:[%s6 + $0x18] sm:$0xff]
      %v198 = vld [vmem:[%s6 + $0x20] sm:$0xff]
      %v199 = vld [vmem:[%s6 + $0x28] sm:$0xff]
      %v200 = vld [vmem:[%s6 + $0x30] sm:$0xff]
      %v201 = vld [vmem:[%s6 + $0x38] sm:$0xff]
      %v202 = vld [vmem:[%s6 + $0x40] sm:$0xff]
      %v203 = vld [vmem:[%s6 + $0x48] sm:$0xff]
      %v204 = vld [vmem:[%s6 + $0x50] sm:$0xff]
      %v205 = vld [vmem:[%s6 + $0x58] sm:$0xff]
      %v206 = vld [vmem:[%s6 + $0x60] sm:$0xff]
      %v207 = vld [vmem:[%s6 + $0x68] sm:$0xff]
      %v208 = vld [vmem:[%s6 + $0x70] sm:$0xff]
      %v209 = vld [vmem:[%s6 + $0x78] sm:$0xff]
      %v210 = vld [vmem:[%s7] sm:$0xff]
      %v211 = vld [vmem:[%s7 + $0x8] sm:$0xff]
      %v212 = vld [vmem:[%s7 + $0x10] sm:$0xff]
      %v213 = vld [vmem:[%s7 + $0x18] sm:$0xff]
      %v214 = vld [vmem:[%s7 + $0x20] sm:$0xff]
      %v215 = vld [vmem:[%s7 + $0x28] sm:$0xff]
      %v216 = vld [vmem:[%s7 + $0x30] sm:$0xff]
      %v217 = vld [vmem:[%s7 + $0x38] sm:$0xff]
      %v218 = vld [vmem:[%s7 + $0x40] sm:$0xff]
      %v219 = vld [vmem:[%s7 + $0x48] sm:$0xff]
      %v220 = vld [vmem:[%s7 + $0x50] sm:$0xff]
      %v221 = vld [vmem:[%s7 + $0x58] sm:$0xff]
      %v222 = vld [vmem:[%s7 + $0x60] sm:$0xff]
      %v223 = vld [vmem:[%s7 + $0x68] sm:$0xff]
      %v224 = vld [vmem:[%s7 + $0x70] sm:$0xff]
      %v225 = vld [vmem:[%s7 + $0x78] sm:$0xff]
      %v226 = vsub.f32 %v194, %v210
      %v227 = vsub.f32 %v195, %v211
      %v228 = vsub.f32 %v196, %v212
      %v229 = vsub.f32 %v197, %v213
      %v230 = vsub.f32 %v198, %v214
      %v231 = vsub.f32 %v199, %v215
      %v232 = vsub.f32 %v200, %v216
      %v233 = vsub.f32 %v201, %v217
      %v234 = vsub.f32 %v202, %v218
      %v235 = vsub.f32 %v203, %v219
      %v236 = vsub.f32 %v204, %v220
      %v237 = vsub.f32 %v205, %v221
      %v238 = vsub.f32 %v206, %v222
      %v239 = vsub.f32 %v207, %v223
      %v240 = vsub.f32 %v208, %v224
      %v241 = vsub.f32 %v209, %v225
      %v242 = vmul.f32 %v160, %v226
      %v243 = vmul.f32 %v160, %v227
      %v244 = vmul.f32 %v160, %v228
      %v245 = vmul.f32 %v160, %v229
      %v246 = vmul.f32 %v160, %v230
      %v247 = vmul.f32 %v160, %v231
      %v248 = vmul.f32 %v160, %v232
      %v249 = vmul.f32 %v160, %v233
      %v250 = vmul.f32 %v160, %v234
      %v251 = vmul.f32 %v160, %v235
      %v252 = vmul.f32 %v160, %v236
      %v253 = vmul.f32 %v160, %v237
      %v254 = vmul.f32 %v160, %v238
      %v255 = vmul.f32 %v160, %v239
      %v256 = vmul.f32 %v160, %v240
      %v257 = vmul.f32 %v160, %v241
      %v258 = vand.u32 2147483647, %v242
      %v259 = vand.u32 2147483647, %v243
      %v260 = vand.u32 2147483647, %v244
      %v261 = vand.u32 2147483647, %v245
      %v262 = vand.u32 2147483647, %v246
      %v263 = vand.u32 2147483647, %v247
      %v264 = vand.u32 2147483647, %v248
      %v265 = vand.u32 2147483647, %v249
      %v266 = vand.u32 2147483647, %v250
      %v267 = vand.u32 2147483647, %v251
      %v268 = vand.u32 2147483647, %v252
      %v269 = vand.u32 2147483647, %v253
      %v270 = vand.u32 2147483647, %v254
      %v271 = vand.u32 2147483647, %v255
      %v272 = vand.u32 2147483647, %v256
      %v273 = vand.u32 2147483647, %v257
      %v274 = vadd.f32 %v178, %v258
      %v275 = vadd.f32 %v179, %v259
      %v276 = vadd.f32 %v180, %v260
      %v277 = vadd.f32 %v181, %v261
      %v278 = vadd.f32 %v182, %v262
      %v279 = vadd.f32 %v183, %v263
      %v280 = vadd.f32 %v184, %v264
      %v281 = vadd.f32 %v185, %v265
      %v282 = vadd.f32 %v186, %v266
      %v283 = vadd.f32 %v187, %v267
      %v284 = vadd.f32 %v188, %v268
      %v285 = vadd.f32 %v189, %v269
      %v286 = vadd.f32 %v190, %v270
      %v287 = vadd.f32 %v191, %v271
      %v288 = vadd.f32 %v192, %v272
      %v289 = vadd.f32 %v193, %v273
      %v290 = vld [vmem:[%s8] sm:$0xff]
      %v291 = vld [vmem:[%s8 + $0x8] sm:$0xff]
      %v292 = vld [vmem:[%s8 + $0x10] sm:$0xff]
      %v293 = vld [vmem:[%s8 + $0x18] sm:$0xff]
      %v294 = vld [vmem:[%s8 + $0x20] sm:$0xff]
      %v295 = vld [vmem:[%s8 + $0x28] sm:$0xff]
      %v296 = vld [vmem:[%s8 + $0x30] sm:$0xff]
      %v297 = vld [vmem:[%s8 + $0x38] sm:$0xff]
      %v298 = vld [vmem:[%s8 + $0x40] sm:$0xff]
      %v299 = vld [vmem:[%s8 + $0x48] sm:$0xff]
      %v300 = vld [vmem:[%s8 + $0x50] sm:$0xff]
      %v301 = vld [vmem:[%s8 + $0x58] sm:$0xff]
      %v302 = vld [vmem:[%s8 + $0x60] sm:$0xff]
      %v303 = vld [vmem:[%s8 + $0x68] sm:$0xff]
      %v304 = vld [vmem:[%s8 + $0x70] sm:$0xff]
      %v305 = vld [vmem:[%s8 + $0x78] sm:$0xff]
      %v306 = vld [vmem:[%s9] sm:$0xff]
      %v307 = vld [vmem:[%s9 + $0x8] sm:$0xff]
      %v308 = vld [vmem:[%s9 + $0x10] sm:$0xff]
      %v309 = vld [vmem:[%s9 + $0x18] sm:$0xff]
      %v310 = vld [vmem:[%s9 + $0x20] sm:$0xff]
      %v311 = vld [vmem:[%s9 + $0x28] sm:$0xff]
      %v312 = vld [vmem:[%s9 + $0x30] sm:$0xff]
      %v313 = vld [vmem:[%s9 + $0x38] sm:$0xff]
      %v314 = vld [vmem:[%s9 + $0x40] sm:$0xff]
      %v315 = vld [vmem:[%s9 + $0x48] sm:$0xff]
      %v316 = vld [vmem:[%s9 + $0x50] sm:$0xff]
      %v317 = vld [vmem:[%s9 + $0x58] sm:$0xff]
      %v318 = vld [vmem:[%s9 + $0x60] sm:$0xff]
      %v319 = vld [vmem:[%s9 + $0x68] sm:$0xff]
      %v320 = vld [vmem:[%s9 + $0x70] sm:$0xff]
      %v321 = vld [vmem:[%s9 + $0x78] sm:$0xff]
      %v322 = vsub.f32 %v290, %v306
      %v323 = vsub.f32 %v291, %v307
      %v324 = vsub.f32 %v292, %v308
      %v325 = vsub.f32 %v293, %v309
      %v326 = vsub.f32 %v294, %v310
      %v327 = vsub.f32 %v295, %v311
      %v328 = vsub.f32 %v296, %v312
      %v329 = vsub.f32 %v297, %v313
      %v330 = vsub.f32 %v298, %v314
      %v331 = vsub.f32 %v299, %v315
      %v332 = vsub.f32 %v300, %v316
      %v333 = vsub.f32 %v301, %v317
      %v334 = vsub.f32 %v302, %v318
      %v335 = vsub.f32 %v303, %v319
      %v336 = vsub.f32 %v304, %v320
      %v337 = vsub.f32 %v305, %v321
      %v338 = vmul.f32 %v160, %v322
      %v339 = vmul.f32 %v160, %v323
      %v340 = vmul.f32 %v160, %v324
      %v341 = vmul.f32 %v160, %v325
      %v342 = vmul.f32 %v160, %v326
      %v343 = vmul.f32 %v160, %v327
      %v344 = vmul.f32 %v160, %v328
      %v345 = vmul.f32 %v160, %v329
      %v346 = vmul.f32 %v160, %v330
      %v347 = vmul.f32 %v160, %v331
      %v348 = vmul.f32 %v160, %v332
      %v349 = vmul.f32 %v160, %v333
      %v350 = vmul.f32 %v160, %v334
      %v351 = vmul.f32 %v160, %v335
      %v352 = vmul.f32 %v160, %v336
      %v353 = vmul.f32 %v160, %v337
      %v354 = vand.u32 2147483647, %v338
      %v355 = vand.u32 2147483647, %v339
      %v356 = vand.u32 2147483647, %v340
      %v357 = vand.u32 2147483647, %v341
      %v358 = vand.u32 2147483647, %v342
      %v359 = vand.u32 2147483647, %v343
      %v360 = vand.u32 2147483647, %v344
      %v361 = vand.u32 2147483647, %v345
      %v362 = vand.u32 2147483647, %v346
      %v363 = vand.u32 2147483647, %v347
      %v364 = vand.u32 2147483647, %v348
      %v365 = vand.u32 2147483647, %v349
      %v366 = vand.u32 2147483647, %v350
      %v367 = vand.u32 2147483647, %v351
      %v368 = vand.u32 2147483647, %v352
      %v369 = vand.u32 2147483647, %v353
      %v370 = vadd.f32 %v274, %v354
      %v371 = vadd.f32 %v275, %v355
      %v372 = vadd.f32 %v276, %v356
      %v373 = vadd.f32 %v277, %v357
      %v374 = vadd.f32 %v278, %v358
      %v375 = vadd.f32 %v279, %v359
      %v376 = vadd.f32 %v280, %v360
      %v377 = vadd.f32 %v281, %v361
      %v378 = vadd.f32 %v282, %v362
      %v379 = vadd.f32 %v283, %v363
      %v380 = vadd.f32 %v284, %v364
      %v381 = vadd.f32 %v285, %v365
      %v382 = vadd.f32 %v286, %v366
      %v383 = vadd.f32 %v287, %v367
      %v384 = vadd.f32 %v288, %v368
      %v385 = vadd.f32 %v289, %v369
      %v386 = vld [vmem:[#allocation4] sm:$0x1]
      %v387 = vadd.f32 %v386, %v106
      %388 = vst [vmem:[#allocation4] sm:$0x1] %v387
      %v389 = vld [vmem:[#allocation5] sm:$0xff]
      %vm390 = vcmask 261120
      %v391 = vsel %vm390, %v370, 0.0
      %v392 = vsel %vm390, %v371, 0.0
      %v393 = vadd.f32 %v391, %v392
      %v394 = vsel %vm390, %v372, 0.0
      %v395 = vadd.f32 %v393, %v394
      %v396 = vsel %vm390, %v373, 0.0
      %v397 = vadd.f32 %v395, %v396
      %v398 = vsel %vm390, %v374, 0.0
      %v399 = vadd.f32 %v397, %v398
      %v400 = vsel %vm390, %v375, 0.0
      %v401 = vadd.f32 %v399, %v400
      %v402 = vsel %vm390, %v376, 0.0
      %v403 = vadd.f32 %v401, %v402
      %v404 = vsel %vm390, %v377, 0.0
      %v405 = vadd.f32 %v403, %v404
      %v406 = vsel %vm390, %v378, 0.0
      %v407 = vadd.f32 %v405, %v406
      %v408 = vsel %vm390, %v379, 0.0
      %v409 = vadd.f32 %v407, %v408
      %v410 = vsel %vm390, %v380, 0.0
      %v411 = vadd.f32 %v409, %v410
      %v412 = vsel %vm390, %v381, 0.0
      %v413 = vadd.f32 %v411, %v412
      %v414 = vsel %vm390, %v382, 0.0
      %v415 = vadd.f32 %v413, %v414
      %v416 = vsel %vm390, %v383, 0.0
      %v417 = vadd.f32 %v415, %v416
      %v418 = vsel %vm390, %v384, 0.0
      %v419 = vadd.f32 %v417, %v418
      %v420 = vsel %vm390, %v385, 0.0
      %v421 = vadd.f32 %v419, %v420
      %v422 = vadd.f32 %v389, %v421
      %423 = vst.msk [vmem:[#allocation5] sm:$0xff] %vm390, %v422
    $region65: #{tpu_custom_call.1} parent=1 // pred_fallthru
      _
    // Predicated region
    $region66: #{tpu_custom_call.1} parent=1 // pred_check
      %p424 = pneg %p61
    $region67: #{tpu_custom_call.1} parent=1 // pred_check_branch
      %426 = sbr.rel (%p424) target = $region69
    $region68: #{tpu_custom_call.1} parent=1 // pred_region
      %v427 = vld [vmem:[%s1] sm:$0x1]
      %v428 = vld [vmem:[%s2] sm:$0x1]
      %v429 = vsub.f32 %v427, %v428
      %v430 = vsub.f32 0.0, %v429
      %v431 = vmax.f32 %v430, 0.0
      %v432 = vand.u32 2147483647, %v429
      %v433 = vsub.f32 0.0, %v432
      %v434 = vmul.f32 %v433, 1.442695
      %v435 = vpow.pop %v434
      %v436 = vadd.f32 %v435, 1.0
      %v437 = vlog2.pop %v436
      %v438 = vmul.f32 %v437, 0.6931472
      %v439 = vmul.f32 -0.5, %v435
      %v440 = vadd.f32 %v439, 1.0
      %v441 = vmul.f32 %v440, %v435
      %v442 = vand.u32 2147483647, %v435
      %vm443 = vcmp.lt.f32.partialorder %v442, 0.0004427343
      %v444 = vsel %vm443, %v441, %v438
      %v445 = vadd.f32 %v431, %v444
      %v446 = vld [vmem:[%s3] sm:$0x1]
      %v447 = vld [vmem:[%s4] sm:$0xff]
      %v448 = vld [vmem:[%s4 + $0x8] sm:$0xff]
      %v449 = vld [vmem:[%s4 + $0x10] sm:$0xff]
      %v450 = vld [vmem:[%s4 + $0x18] sm:$0xff]
      %v451 = vld [vmem:[%s4 + $0x20] sm:$0xff]
      %v452 = vld [vmem:[%s4 + $0x28] sm:$0xff]
      %v453 = vld [vmem:[%s4 + $0x30] sm:$0xff]
      %v454 = vld [vmem:[%s4 + $0x38] sm:$0xff]
      %v455 = vld [vmem:[%s4 + $0x40] sm:$0xff]
      %v456 = vld [vmem:[%s4 + $0x48] sm:$0xff]
      %v457 = vld [vmem:[%s4 + $0x50] sm:$0xff]
      %v458 = vld [vmem:[%s4 + $0x58] sm:$0xff]
      %v459 = vld [vmem:[%s4 + $0x60] sm:$0xff]
      %v460 = vld [vmem:[%s4 + $0x68] sm:$0xff]
      %v461 = vld [vmem:[%s4 + $0x70] sm:$0xff]
      %v462 = vld [vmem:[%s4 + $0x78] sm:$0xff]
      %v463 = vld [vmem:[%s5] sm:$0xff]
      %v464 = vld [vmem:[%s5 + $0x8] sm:$0xff]
      %v465 = vld [vmem:[%s5 + $0x10] sm:$0xff]
      %v466 = vld [vmem:[%s5 + $0x18] sm:$0xff]
      %v467 = vld [vmem:[%s5 + $0x20] sm:$0xff]
      %v468 = vld [vmem:[%s5 + $0x28] sm:$0xff]
      %v469 = vld [vmem:[%s5 + $0x30] sm:$0xff]
      %v470 = vld [vmem:[%s5 + $0x38] sm:$0xff]
      %v471 = vld [vmem:[%s5 + $0x40] sm:$0xff]
      %v472 = vld [vmem:[%s5 + $0x48] sm:$0xff]
      %v473 = vld [vmem:[%s5 + $0x50] sm:$0xff]
      %v474 = vld [vmem:[%s5 + $0x58] sm:$0xff]
      %v475 = vld [vmem:[%s5 + $0x60] sm:$0xff]
      %v476 = vld [vmem:[%s5 + $0x68] sm:$0xff]
      %v477 = vld [vmem:[%s5 + $0x70] sm:$0xff]
      %v478 = vld [vmem:[%s5 + $0x78] sm:$0xff]
      %v479 = vsub.f32 %v447, %v463
      %v480 = vsub.f32 %v448, %v464
      %v481 = vsub.f32 %v449, %v465
      %v482 = vsub.f32 %v450, %v466
      %v483 = vsub.f32 %v451, %v467
      %v484 = vsub.f32 %v452, %v468
      %v485 = vsub.f32 %v453, %v469
      %v486 = vsub.f32 %v454, %v470
      %v487 = vsub.f32 %v455, %v471
      %v488 = vsub.f32 %v456, %v472
      %v489 = vsub.f32 %v457, %v473
      %v490 = vsub.f32 %v458, %v474
      %v491 = vsub.f32 %v459, %v475
      %v492 = vsub.f32 %v460, %v476
      %v493 = vsub.f32 %v461, %v477
      %v494 = vsub.f32 %v462, %v478
      %v496 = vlaneseq
      %v497 = vshrl.u32 %v496, 7
      %v498 = vsub.s32 0, %v497
      %v499 = vrot.slane %v446, %v498
      %v501 = vmul.f32 %v499, %v479
      %v502 = vmul.f32 %v499, %v480
      %v503 = vmul.f32 %v499, %v481
      %v504 = vmul.f32 %v499, %v482
      %v505 = vmul.f32 %v499, %v483
      %v506 = vmul.f32 %v499, %v484
      %v507 = vmul.f32 %v499, %v485
      %v508 = vmul.f32 %v499, %v486
      %v509 = vmul.f32 %v499, %v487
      %v510 = vmul.f32 %v499, %v488
      %v511 = vmul.f32 %v499, %v489
      %v512 = vmul.f32 %v499, %v490
      %v513 = vmul.f32 %v499, %v491
      %v514 = vmul.f32 %v499, %v492
      %v515 = vmul.f32 %v499, %v493
      %v516 = vmul.f32 %v499, %v494
      %v517 = vand.u32 2147483647, %v501
      %v518 = vand.u32 2147483647, %v502
      %v519 = vand.u32 2147483647, %v503
      %v520 = vand.u32 2147483647, %v504
      %v521 = vand.u32 2147483647, %v505
      %v522 = vand.u32 2147483647, %v506
      %v523 = vand.u32 2147483647, %v507
      %v524 = vand.u32 2147483647, %v508
      %v525 = vand.u32 2147483647, %v509
      %v526 = vand.u32 2147483647, %v510
      %v527 = vand.u32 2147483647, %v511
      %v528 = vand.u32 2147483647, %v512
      %v529 = vand.u32 2147483647, %v513
      %v530 = vand.u32 2147483647, %v514
      %v531 = vand.u32 2147483647, %v515
      %v532 = vand.u32 2147483647, %v516
      %v533 = vld [vmem:[%s6] sm:$0xff]
      %v534 = vld [vmem:[%s6 + $0x8] sm:$0xff]
      %v535 = vld [vmem:[%s6 + $0x10] sm:$0xff]
      %v536 = vld [vmem:[%s6 + $0x18] sm:$0xff]
      %v537 = vld [vmem:[%s6 + $0x20] sm:$0xff]
      %v538 = vld [vmem:[%s6 + $0x28] sm:$0xff]
      %v539 = vld [vmem:[%s6 + $0x30] sm:$0xff]
      %v540 = vld [vmem:[%s6 + $0x38] sm:$0xff]
      %v541 = vld [vmem:[%s6 + $0x40] sm:$0xff]
      %v542 = vld [vmem:[%s6 + $0x48] sm:$0xff]
      %v543 = vld [vmem:[%s6 + $0x50] sm:$0xff]
      %v544 = vld [vmem:[%s6 + $0x58] sm:$0xff]
      %v545 = vld [vmem:[%s6 + $0x60] sm:$0xff]
      %v546 = vld [vmem:[%s6 + $0x68] sm:$0xff]
      %v547 = vld [vmem:[%s6 + $0x70] sm:$0xff]
      %v548 = vld [vmem:[%s6 + $0x78] sm:$0xff]
      %v549 = vld [vmem:[%s7] sm:$0xff]
      %v550 = vld [vmem:[%s7 + $0x8] sm:$0xff]
      %v551 = vld [vmem:[%s7 + $0x10] sm:$0xff]
      %v552 = vld [vmem:[%s7 + $0x18] sm:$0xff]
      %v553 = vld [vmem:[%s7 + $0x20] sm:$0xff]
      %v554 = vld [vmem:[%s7 + $0x28] sm:$0xff]
      %v555 = vld [vmem:[%s7 + $0x30] sm:$0xff]
      %v556 = vld [vmem:[%s7 + $0x38] sm:$0xff]
      %v557 = vld [vmem:[%s7 + $0x40] sm:$0xff]
      %v558 = vld [vmem:[%s7 + $0x48] sm:$0xff]
      %v559 = vld [vmem:[%s7 + $0x50] sm:$0xff]
      %v560 = vld [vmem:[%s7 + $0x58] sm:$0xff]
      %v561 = vld [vmem:[%s7 + $0x60] sm:$0xff]
      %v562 = vld [vmem:[%s7 + $0x68] sm:$0xff]
      %v563 = vld [vmem:[%s7 + $0x70] sm:$0xff]
      %v564 = vld [vmem:[%s7 + $0x78] sm:$0xff]
      %v565 = vsub.f32 %v533, %v549
      %v566 = vsub.f32 %v534, %v550
      %v567 = vsub.f32 %v535, %v551
      %v568 = vsub.f32 %v536, %v552
      %v569 = vsub.f32 %v537, %v553
      %v570 = vsub.f32 %v538, %v554
      %v571 = vsub.f32 %v539, %v555
      %v572 = vsub.f32 %v540, %v556
      %v573 = vsub.f32 %v541, %v557
      %v574 = vsub.f32 %v542, %v558
      %v575 = vsub.f32 %v543, %v559
      %v576 = vsub.f32 %v544, %v560
      %v577 = vsub.f32 %v545, %v561
      %v578 = vsub.f32 %v546, %v562
      %v579 = vsub.f32 %v547, %v563
      %v580 = vsub.f32 %v548, %v564
      %v581 = vmul.f32 %v499, %v565
      %v582 = vmul.f32 %v499, %v566
      %v583 = vmul.f32 %v499, %v567
      %v584 = vmul.f32 %v499, %v568
      %v585 = vmul.f32 %v499, %v569
      %v586 = vmul.f32 %v499, %v570
      %v587 = vmul.f32 %v499, %v571
      %v588 = vmul.f32 %v499, %v572
      %v589 = vmul.f32 %v499, %v573
      %v590 = vmul.f32 %v499, %v574
      %v591 = vmul.f32 %v499, %v575
      %v592 = vmul.f32 %v499, %v576
      %v593 = vmul.f32 %v499, %v577
      %v594 = vmul.f32 %v499, %v578
      %v595 = vmul.f32 %v499, %v579
      %v596 = vmul.f32 %v499, %v580
      %v597 = vand.u32 2147483647, %v581
      %v598 = vand.u32 2147483647, %v582
      %v599 = vand.u32 2147483647, %v583
      %v600 = vand.u32 2147483647, %v584
      %v601 = vand.u32 2147483647, %v585
      %v602 = vand.u32 2147483647, %v586
      %v603 = vand.u32 2147483647, %v587
      %v604 = vand.u32 2147483647, %v588
      %v605 = vand.u32 2147483647, %v589
      %v606 = vand.u32 2147483647, %v590
      %v607 = vand.u32 2147483647, %v591
      %v608 = vand.u32 2147483647, %v592
      %v609 = vand.u32 2147483647, %v593
      %v610 = vand.u32 2147483647, %v594
      %v611 = vand.u32 2147483647, %v595
      %v612 = vand.u32 2147483647, %v596
      %v613 = vadd.f32 %v517, %v597
      %v614 = vadd.f32 %v518, %v598
      %v615 = vadd.f32 %v519, %v599
      %v616 = vadd.f32 %v520, %v600
      %v617 = vadd.f32 %v521, %v601
      %v618 = vadd.f32 %v522, %v602
      %v619 = vadd.f32 %v523, %v603
      %v620 = vadd.f32 %v524, %v604
      %v621 = vadd.f32 %v525, %v605
      %v622 = vadd.f32 %v526, %v606
      %v623 = vadd.f32 %v527, %v607
      %v624 = vadd.f32 %v528, %v608
      %v625 = vadd.f32 %v529, %v609
      %v626 = vadd.f32 %v530, %v610
      %v627 = vadd.f32 %v531, %v611
      %v628 = vadd.f32 %v532, %v612
      %v629 = vld [vmem:[%s8] sm:$0xff]
      %v630 = vld [vmem:[%s8 + $0x8] sm:$0xff]
      %v631 = vld [vmem:[%s8 + $0x10] sm:$0xff]
      %v632 = vld [vmem:[%s8 + $0x18] sm:$0xff]
      %v633 = vld [vmem:[%s8 + $0x20] sm:$0xff]
      %v634 = vld [vmem:[%s8 + $0x28] sm:$0xff]
      %v635 = vld [vmem:[%s8 + $0x30] sm:$0xff]
      %v636 = vld [vmem:[%s8 + $0x38] sm:$0xff]
      %v637 = vld [vmem:[%s8 + $0x40] sm:$0xff]
      %v638 = vld [vmem:[%s8 + $0x48] sm:$0xff]
      %v639 = vld [vmem:[%s8 + $0x50] sm:$0xff]
      %v640 = vld [vmem:[%s8 + $0x58] sm:$0xff]
      %v641 = vld [vmem:[%s8 + $0x60] sm:$0xff]
      %v642 = vld [vmem:[%s8 + $0x68] sm:$0xff]
      %v643 = vld [vmem:[%s8 + $0x70] sm:$0xff]
      %v644 = vld [vmem:[%s8 + $0x78] sm:$0xff]
      %v645 = vld [vmem:[%s9] sm:$0xff]
      %v646 = vld [vmem:[%s9 + $0x8] sm:$0xff]
      %v647 = vld [vmem:[%s9 + $0x10] sm:$0xff]
      %v648 = vld [vmem:[%s9 + $0x18] sm:$0xff]
      %v649 = vld [vmem:[%s9 + $0x20] sm:$0xff]
      %v650 = vld [vmem:[%s9 + $0x28] sm:$0xff]
      %v651 = vld [vmem:[%s9 + $0x30] sm:$0xff]
      %v652 = vld [vmem:[%s9 + $0x38] sm:$0xff]
      %v653 = vld [vmem:[%s9 + $0x40] sm:$0xff]
      %v654 = vld [vmem:[%s9 + $0x48] sm:$0xff]
      %v655 = vld [vmem:[%s9 + $0x50] sm:$0xff]
      %v656 = vld [vmem:[%s9 + $0x58] sm:$0xff]
      %v657 = vld [vmem:[%s9 + $0x60] sm:$0xff]
      %v658 = vld [vmem:[%s9 + $0x68] sm:$0xff]
      %v659 = vld [vmem:[%s9 + $0x70] sm:$0xff]
      %v660 = vld [vmem:[%s9 + $0x78] sm:$0xff]
      %v661 = vsub.f32 %v629, %v645
      %v662 = vsub.f32 %v630, %v646
      %v663 = vsub.f32 %v631, %v647
      %v664 = vsub.f32 %v632, %v648
      %v665 = vsub.f32 %v633, %v649
      %v666 = vsub.f32 %v634, %v650
      %v667 = vsub.f32 %v635, %v651
      %v668 = vsub.f32 %v636, %v652
      %v669 = vsub.f32 %v637, %v653
      %v670 = vsub.f32 %v638, %v654
      %v671 = vsub.f32 %v639, %v655
      %v672 = vsub.f32 %v640, %v656
      %v673 = vsub.f32 %v641, %v657
      %v674 = vsub.f32 %v642, %v658
      %v675 = vsub.f32 %v643, %v659
      %v676 = vsub.f32 %v644, %v660
      %v677 = vmul.f32 %v499, %v661
      %v678 = vmul.f32 %v499, %v662
      %v679 = vmul.f32 %v499, %v663
      %v680 = vmul.f32 %v499, %v664
      %v681 = vmul.f32 %v499, %v665
      %v682 = vmul.f32 %v499, %v666
      %v683 = vmul.f32 %v499, %v667
      %v684 = vmul.f32 %v499, %v668
      %v685 = vmul.f32 %v499, %v669
      %v686 = vmul.f32 %v499, %v670
      %v687 = vmul.f32 %v499, %v671
      %v688 = vmul.f32 %v499, %v672
      %v689 = vmul.f32 %v499, %v673
      %v690 = vmul.f32 %v499, %v674
      %v691 = vmul.f32 %v499, %v675
      %v692 = vmul.f32 %v499, %v676
      %v693 = vand.u32 2147483647, %v677
      %v694 = vand.u32 2147483647, %v678
      %v695 = vand.u32 2147483647, %v679
      %v696 = vand.u32 2147483647, %v680
      %v697 = vand.u32 2147483647, %v681
      %v698 = vand.u32 2147483647, %v682
      %v699 = vand.u32 2147483647, %v683
      %v700 = vand.u32 2147483647, %v684
      %v701 = vand.u32 2147483647, %v685
      %v702 = vand.u32 2147483647, %v686
      %v703 = vand.u32 2147483647, %v687
      %v704 = vand.u32 2147483647, %v688
      %v705 = vand.u32 2147483647, %v689
      %v706 = vand.u32 2147483647, %v690
      %v707 = vand.u32 2147483647, %v691
      %v708 = vand.u32 2147483647, %v692
      %v709 = vadd.f32 %v613, %v693
      %v710 = vadd.f32 %v614, %v694
      %v711 = vadd.f32 %v615, %v695
      %v712 = vadd.f32 %v616, %v696
      %v713 = vadd.f32 %v617, %v697
      %v714 = vadd.f32 %v618, %v698
      %v715 = vadd.f32 %v619, %v699
      %v716 = vadd.f32 %v620, %v700
      %v717 = vadd.f32 %v621, %v701
      %v718 = vadd.f32 %v622, %v702
      %v719 = vadd.f32 %v623, %v703
      %v720 = vadd.f32 %v624, %v704
      %v721 = vadd.f32 %v625, %v705
      %v722 = vadd.f32 %v626, %v706
      %v723 = vadd.f32 %v627, %v707
      %v724 = vadd.f32 %v628, %v708
      %v725 = vlaneseq
      %v726 = vshrl.u32 %v725, 7
      %v727 = vmul.u32 %v726, 128
      %v728 = vlaneseq
      %v729 = vand.u32 %v728, 127
      %v730 = vadd.s32 %v727, %v729
      %vm731 = vcmp.lt.s32.totalorder %v730, 8
      %v732 = vsel %vm731, %v445, 0.0
      %v733 = vadd.s32 %v726, 8
      %v734 = vadd.s32 %v726, 16
      %v735 = vadd.s32 %v726, 24
      %v736 = vadd.s32 %v726, 32
      %v737 = vadd.s32 %v726, 40
      %v738 = vadd.s32 %v726, 48
      %v739 = vadd.s32 %v726, 56
      %v740 = vadd.s32 %v726, 64
      %v741 = vadd.s32 %v726, 72
      %v742 = vadd.s32 %v726, 80
      %v743 = vadd.s32 %v726, 88
      %v744 = vadd.s32 %v726, 96
      %v745 = vadd.s32 %v726, 104
      %v746 = vadd.s32 %v726, 112
      %v747 = vadd.s32 %v726, 120
      %vm748 = vcmp.lt.s32.totalorder %v726, 8
      %vm749 = vcmp.lt.s32.totalorder %v733, 8
      %vm750 = vcmp.lt.s32.totalorder %v734, 8
      %vm751 = vcmp.lt.s32.totalorder %v735, 8
      %vm752 = vcmp.lt.s32.totalorder %v736, 8
      %vm753 = vcmp.lt.s32.totalorder %v737, 8
      %vm754 = vcmp.lt.s32.totalorder %v738, 8
      %vm755 = vcmp.lt.s32.totalorder %v739, 8
      %vm756 = vcmp.lt.s32.totalorder %v740, 8
      %vm757 = vcmp.lt.s32.totalorder %v741, 8
      %vm758 = vcmp.lt.s32.totalorder %v742, 8
      %vm759 = vcmp.lt.s32.totalorder %v743, 8
      %vm760 = vcmp.lt.s32.totalorder %v744, 8
      %vm761 = vcmp.lt.s32.totalorder %v745, 8
      %vm762 = vcmp.lt.s32.totalorder %v746, 8
      %vm763 = vcmp.lt.s32.totalorder %v747, 8
      %v764 = vsel %vm748, %v709, 0.0
      %v765 = vsel %vm749, %v710, 0.0
      %v766 = vsel %vm750, %v711, 0.0
      %v767 = vsel %vm751, %v712, 0.0
      %v768 = vsel %vm752, %v713, 0.0
      %v769 = vsel %vm753, %v714, 0.0
      %v770 = vsel %vm754, %v715, 0.0
      %v771 = vsel %vm755, %v716, 0.0
      %v772 = vsel %vm756, %v717, 0.0
      %v773 = vsel %vm757, %v718, 0.0
      %v774 = vsel %vm758, %v719, 0.0
      %v775 = vsel %vm759, %v720, 0.0
      %v776 = vsel %vm760, %v721, 0.0
      %v777 = vsel %vm761, %v722, 0.0
      %v778 = vsel %vm762, %v723, 0.0
      %v779 = vsel %vm763, %v724, 0.0
      %v780 = vld [vmem:[#allocation4] sm:$0x1]
      %v781 = vadd.f32 %v780, %v732
      %782 = vst [vmem:[#allocation4] sm:$0x1] %v781
      %v783 = vld [vmem:[#allocation5] sm:$0xff]
      %vm784 = vcmask 261120
      %v785 = vsel %vm784, %v764, 0.0
      %v786 = vsel %vm784, %v765, 0.0
      %v787 = vadd.f32 %v785, %v786
      %v788 = vsel %vm784, %v766, 0.0
      %v789 = vadd.f32 %v787, %v788
      %v790 = vsel %vm784, %v767, 0.0
      %v791 = vadd.f32 %v789, %v790
      %v792 = vsel %vm784, %v768, 0.0
      %v793 = vadd.f32 %v791, %v792
      %v794 = vsel %vm784, %v769, 0.0
      %v795 = vadd.f32 %v793, %v794
      %v796 = vsel %vm784, %v770, 0.0
      %v797 = vadd.f32 %v795, %v796
      %v798 = vsel %vm784, %v771, 0.0
      %v799 = vadd.f32 %v797, %v798
      %v800 = vsel %vm784, %v772, 0.0
      %v801 = vadd.f32 %v799, %v800
      %v802 = vsel %vm784, %v773, 0.0
      %v803 = vadd.f32 %v801, %v802
      %v804 = vsel %vm784, %v774, 0.0
      %v805 = vadd.f32 %v803, %v804
      %v806 = vsel %vm784, %v775, 0.0
      %v807 = vadd.f32 %v805, %v806
      %v808 = vsel %vm784, %v776, 0.0
      %v809 = vadd.f32 %v807, %v808
      %v810 = vsel %vm784, %v777, 0.0
      %v811 = vadd.f32 %v809, %v810
      %v812 = vsel %vm784, %v778, 0.0
      %v813 = vadd.f32 %v811, %v812
      %v814 = vsel %vm784, %v779, 0.0
      %v815 = vadd.f32 %v813, %v814
      %v816 = vadd.f32 %v783, %v815
      %817 = vst.msk [vmem:[#allocation5] sm:$0xff] %vm784, %v816
      %s818 = sld [smem:[#allocation6]]
      %s819 = sld [smem:[#allocation6 + $0x1]]
      %v820 = vld [vmem:[#allocation4] sm:$0x1]
      %vm821 = vcmask 1040384
      %v822 = vsel %vm821, %v820, 0.0
      %823 = vadd.xlane.f32.xlu0 %v822
      %v824 = vpop.xlane.xlu0 %823
      %v825 = vrot.slane %v824, 4
      %v826 = vadd.f32 %v824, %v825
      %v827 = vrot.slane %v826, 2
      %v828 = vadd.f32 %v826, %v827
      %v829 = vrot.slane %v828, 1
      %v830 = vadd.f32 %v828, %v829
      %s831 = vtos %v830
      %v832 = vstv %s831
      %v833 = vmul.f32 %v832, 0.125
      %v834 = vld [vmem:[#allocation2] sm:$0xff]
      %835 = vmax.xlane.f32.xlu0 %v834
      %v836 = vpop.xlane.xlu0 %835
      %v837 = vrot.slane %v836, 4
      %v838 = vmax.f32 %v836, %v837
      %v839 = vrot.slane %v838, 2
      %v840 = vmax.f32 %v838, %v839
      %v841 = vrot.slane %v840, 1
      %v842 = vmax.f32 %v840, %v841
      %s843 = vtos %v842
      %v844 = vstv %s843
      %v845 = vld [vmem:[#allocation3] sm:$0xff]
      %846 = vmax.xlane.f32.xlu0 %v845
      %v847 = vpop.xlane.xlu0 %846
      %v848 = vrot.slane %v847, 4
      %v849 = vmax.f32 %v847, %v848
      %v850 = vrot.slane %v849, 2
      %v851 = vmax.f32 %v849, %v850
      %v852 = vrot.slane %v851, 1
      %v853 = vmax.f32 %v851, %v852
      %s854 = vtos %v853
      %v855 = vstv %s854
      %v856 = vadd.f32 %v844, %v855
      %v857 = vstv %s819
      %v858 = vmul.f32 %v857, %v856
      %v859 = vld [vmem:[#allocation5] sm:$0xff]
      %v860 = vsel %vm784, %v859, 0.0
      %861 = vadd.xlane.f32.xlu0 %v860
      %v862 = vpop.xlane.xlu0 %861
      %v863 = vrot.slane %v862, 4
      %v864 = vadd.f32 %v862, %v863
      %v865 = vrot.slane %v864, 2
      %v866 = vadd.f32 %v864, %v865
      %v867 = vrot.slane %v866, 1
      %v868 = vadd.f32 %v866, %v867
      %s869 = vtos %v868
      %v870 = vstv %s869
      %v871 = vstv %s818
      %v872 = vmul.f32 %v871, %v870
      %v873 = vadd.f32 %v833, %v858
      %v874 = vadd.f32 %v873, %v872
      %vm875 = vcmask 0
      %876 = vst.msk [vmem:[#allocation9] sm:$0x1] %vm875, %v874
      %877 = vst.msk [vmem:[#allocation10] sm:$0x1] %vm875, %v833
      %878 = vst.msk [vmem:[#allocation12] sm:$0x1] %vm875, %v872
      %879 = vst.msk [vmem:[#allocation13] sm:$0x1] %vm875, %v858
    $region69: #{tpu_custom_call.1} parent=1 // pred_fallthru
      _
    // Predicated region
    $region70: #{tpu_custom_call.1} parent=1 // pred_check
      _
    $region71: #{tpu_custom_call.1} parent=1 // pred_check_branch
      %881 = sbr.rel (0) target = $region73
    $region72: #{tpu_custom_call.1} parent=1 // pred_region
      %s883 = ssub.s32 16, 16
      %884 = vsyncadd [#allocation7], %s883
      %s886 = sshll.u32 [#allocation9], 4
      %s887 = int_to_ptr.vmem [resolvable:$true] %s886
      %889 = dma.vmem_to_hbm [thread:$0]  %s887, 16, %s12, [#allocation7]
    $region73: #{tpu_custom_call.1} parent=1 // pred_fallthru
      _
    // Predicated region
    $region74: #{tpu_custom_call.1} parent=1 // pred_check
      _
    $region75: #{tpu_custom_call.1} parent=1 // pred_check_branch
      %891 = sbr.rel (0) target = $region77
    $region76: #{tpu_custom_call.1} parent=1 // pred_region
      %s893 = ssub.s32 16, 16
      %894 = vsyncadd [#allocation11], %s893
      %s896 = sshll.u32 [#allocation10], 4
      %s897 = int_to_ptr.vmem [resolvable:$true] %s896
      %899 = dma.vmem_to_hbm [thread:$0]  %s897, 16, %s13, [#allocation11]
    $region77: #{tpu_custom_call.1} parent=1 // pred_fallthru
      _
    // Predicated region
    $region78: #{tpu_custom_call.1} parent=1 // pred_check
      _
    $region79: #{tpu_custom_call.1} parent=1 // pred_check_branch
      %901 = sbr.rel (0) target = $region81
    $region80: #{tpu_custom_call.1} parent=1 // pred_region
      %s903 = ssub.s32 16, 16
      %904 = vsyncadd [#allocation11], %s903
      %s906 = sshll.u32 [#allocation12], 4
      %s907 = int_to_ptr.vmem [resolvable:$true] %s906
      %909 = dma.vmem_to_hbm [thread:$0]  %s907, 16, %s14, [#allocation11]
    $region81: #{tpu_custom_call.1} parent=1 // pred_fallthru
      _
    // Predicated region
    $region82: #{tpu_custom_call.1} parent=1 // pred_check
      _
    $region83: #{tpu_custom_call.1} parent=1 // pred_check_branch
      %911 = sbr.rel (0) target = $region85
    $region84: #{tpu_custom_call.1} parent=1 // pred_region
      %s913 = ssub.s32 16, 16
      %914 = vsyncadd [#allocation14], %s913
      %s916 = sshll.u32 [#allocation13], 4
      %s917 = int_to_ptr.vmem [resolvable:$true] %s916
      %919 = dma.vmem_to_hbm [thread:$0]  %s917, 16, %s15, [#allocation14]
    $region85: #{tpu_custom_call.1} parent=1 // pred_fallthru
      _
    // Predicated region
    $region86: #{tpu_custom_call.1} parent=1 // pred_check
      _
    $region87: #{tpu_custom_call.1} parent=1 // pred_check_branch
      %921 = sbr.rel (0) target = $region89
    $region88: #{tpu_custom_call.1} parent=1 // pred_region
      %922 = dma.done [#allocation7], 16
    $region89: #{tpu_custom_call.1} parent=1 // pred_fallthru
      _
    // Predicated region
    $region90: #{tpu_custom_call.1} parent=1 // pred_check
      _
    $region91: #{tpu_custom_call.1} parent=1 // pred_check_branch
      %924 = sbr.rel (0) target = $region93
    $region92: #{tpu_custom_call.1} parent=1 // pred_region
      %925 = dma.done [#allocation11], 16
    $region93: #{tpu_custom_call.1} parent=1 // pred_fallthru
      _
    // Predicated region
    $region94: #{tpu_custom_call.1} parent=1 // pred_check
      _
    $region95: #{tpu_custom_call.1} parent=1 // pred_check_branch
      %927 = sbr.rel (0) target = $region97
    $region96: #{tpu_custom_call.1} parent=1 // pred_region
      %928 = dma.done [#allocation11], 16
    $region97: #{tpu_custom_call.1} parent=1 // pred_fallthru
      _
    // Predicated region
    $region98: #{tpu_custom_call.1} parent=1 // pred_check
      _
    $region99: #{tpu_custom_call.1} parent=1 // pred_check_branch
      %930 = sbr.rel (0) target = $region101
    $region100: #{tpu_custom_call.1} parent=1 // pred_region
      %931 = dma.done [#allocation14], 16
    $region101: #{tpu_custom_call.1} parent=1 // pred_fallthru
      _
    %932 = vsyncpa [#allocation7], 1
    %933 = vsyncpa [#allocation11], 1
    %934 = vsyncpa [#allocation14], 1
    %935 = vsyncpa [#allocation8], 1

</llo_original>
